<compile_context>
chip_gen: v7x
topology: tpu7x:2x2x1
jax: 0.10.0
libtpu: 0.0.40
codegen_flags: <defaults>
</compile_context>

<pallas_src>
import jax
import jax.numpy as jnp
from jax.experimental import pallas as pl
from jax.experimental.pallas import tpu as pltpu

DIMS = (28 * 28, 512, 256, 128, 64, 1)


def _round_up(x, m):
    return (x + m - 1) // m * m


def discriminator_kernel(x_ref,
                         w1_ref, b1_ref,
                         w2_ref, b2_ref,
                         w3_ref, b3_ref,
                         w4_ref, b4_ref,
                         w5_ref, b5_ref,
                         out_ref):
    """Fused 5-layer MLP forward for one batch tile (all weights resident in VMEM).

    x arrives f32 and is cast to bf16 in-kernel (VPU pack hidden under MXU);
    bf16 MXU matmuls with f32 accumulation; bias add / ReLU epilogues in f32.
    Dropout (p=0.2) is identity in eval mode.
    """
    x = x_ref[...].astype(jnp.bfloat16)                                   # (TB, 784) f32 -> bf16

    h = jnp.dot(x, w1_ref[...], preferred_element_type=jnp.float32) + b1_ref[...]
    h = jnp.maximum(h, 0.0).astype(jnp.bfloat16)                          # ReLU; dropout1 = id

    h = jnp.dot(h, w2_ref[...], preferred_element_type=jnp.float32) + b2_ref[...]
    h = jnp.maximum(h, 0.0).astype(jnp.bfloat16)                          # ReLU; dropout2 = id

    h = jnp.dot(h, w3_ref[...], preferred_element_type=jnp.float32) + b3_ref[...]
    h = jnp.maximum(h, 0.0).astype(jnp.bfloat16)                          # ReLU; dropout3 = id

    h = jnp.dot(h, w4_ref[...], preferred_element_type=jnp.float32) + b4_ref[...]
    h = jnp.maximum(h, 0.0)                                               # (TB, 64) f32; dropout4 = id

    # Final 64 -> 1 layer on the VPU/XLU (broadcast multiply + lane reduction)
    # instead of an MXU matmul that would use 1 of 128/256 output lanes.
    w5_row = w5_ref[...]                                                  # (1, 64) f32
    logits = jnp.sum(h * w5_row, axis=-1, keepdims=True) + b5_ref[...]    # (TB, 1)
    out_ref[...] = jax.nn.sigmoid(logits)                                 # EUP sigmoid


def prepare_params(params):
    """One-time conversion of f32 params to the kernel operand layout.

    Hoisted out of the forward so the bf16 weight casts (and the w5 row reshape)
    are not re-executed in HBM on every call.
    """
    (w1, b1), (w2, b2), (w3, b3), (w4, b4), (w5, b5) = params
    w1, w2, w3, w4 = (w.astype(jnp.bfloat16) for w in (w1, w2, w3, w4))
    w5_row = w5.reshape(1, DIMS[4]).astype(jnp.float32)
    b1, b2, b3, b4, b5 = (b.astype(jnp.float32) for b in (b1, b2, b3, b4, b5))
    return (w1, b1, w2, b2, w3, b3, w4, b4, w5_row, b5)


def _select_tile(B, batch_tile):
    """Pick a batch tile (multiple of 8) per the perf review.

    - tiny B (<=16): single step, TB = round_up(B, 8)
    - 16 < B <= batch_tile: split into >=2 parallel steps so v7x's second
      TensorCore gets work: TB = round_up(cdiv(B, 2), 8)
    - B > batch_tile: TB = batch_tile
    """
    if B <= 16:
        return _round_up(B, 8)
    if B <= batch_tile:
        return _round_up(pl.cdiv(B, 2), 8)
    assert batch_tile % 8 == 0, "batch_tile must be a multiple of 8"
    return batch_tile


def discriminator_forward(z, prepared_params, *, batch_tile=1024):
    """z: (B, 1, 28, 28) float32  ->  (B, 1) float32 in [0, 1]."""
    B = z.shape[0]
    x = z.reshape(B, 28 * 28).astype(jnp.float32)        # view(-1, 784); stays f32 in HBM

    TB = _select_tile(B, batch_tile)
    B_pad = _round_up(B, TB)
    if B_pad != B:
        x = jnp.pad(x, ((0, B_pad - B), (0, 0)))

    (w1, b1, w2, b2, w3, b3, w4, b4, w5_row, b5) = prepared_params

    def rep(a):  # whole-array block, same block every grid step (resident in VMEM)
        return pl.BlockSpec(a.shape, lambda i: (0, 0))

    grid_spec = pltpu.PrefetchScalarGridSpec(
        num_scalar_prefetch=0,
        grid=(B_pad // TB,),
        in_specs=[
            pl.BlockSpec((TB, DIMS[0]), lambda i: (i, 0)),   # f32 x tile over batch
            rep(w1), rep(b1),
            rep(w2), rep(b2),
            rep(w3), rep(b3),
            rep(w4), rep(b4),
            rep(w5_row), rep(b5),
        ],
        out_specs=pl.BlockSpec((TB, 1), lambda i: (i, 0)),
    )

    # --- VMEM budget derived from actual buffer bytes (keeps large TB safe on v7x's 64 MiB).
    operands = (w1, b1, w2, b2, w3, b3, w4, b4, w5_row, b5)
    weight_bytes = sum(int(a.size) * a.dtype.itemsize for a in operands)
    x_tile_bytes = 2 * TB * DIMS[0] * 4            # double-buffered f32 input tile
    out_bytes = 2 * TB * 128 * 4                   # double-buffered output tile (lane-padded, generous)
    interm_bytes = TB * sum(DIMS[1:5]) * 4 * 2     # f32 activations + bf16 copies / spill headroom
    vmem_needed = 2 * weight_bytes + x_tile_bytes + out_bytes + interm_bytes
    vmem_limit = int(min(60 * 1024 * 1024,
                         max(16 * 1024 * 1024, int(vmem_needed * 1.5) + 4 * 1024 * 1024)))

    flops = 2 * B_pad * sum(DIMS[i] * DIMS[i + 1] for i in range(5))
    operand_bytes = int(x.size) * 4 + weight_bytes
    cost = pl.CostEstimate(
        flops=int(flops),
        transcendentals=int(2 * B_pad),            # sigmoid ~ exp + reciprocal per row
        bytes_accessed=int(operand_bytes + B_pad * 4),
    )

    out = pl.pallas_call(
        discriminator_kernel,
        out_shape=jax.ShapeDtypeStruct((B_pad, 1), jnp.float32),
        grid_spec=grid_spec,
        compiler_params=pltpu.CompilerParams(
            dimension_semantics=("parallel",),      # batch steps shard across TCs on v7x
            vmem_limit_bytes=vmem_limit,
        ),
        cost_estimate=cost,
    )(x, w1, b1, w2, b2, w3, b3, w4, b4, w5_row, b5)

    return out[:B]


def init_params(key):
    """Deterministic init mimicking torch.nn.Linear default (U[-1/sqrt(in), 1/sqrt(in)]).

    Weights are stored transposed relative to PyTorch, i.e. (in_features, out_features).
    Biases are stored as (1, out_features) to stay 2-D for TPU layout.
    """
    params = []
    for li in range(5):
        fan_in, fan_out = DIMS[li], DIMS[li + 1]
        key, kw, kb = jax.random.split(key, 3)
        bound = 1.0 / jnp.sqrt(jnp.float32(fan_in))
        w = jax.random.uniform(kw, (fan_in, fan_out), jnp.float32, -bound, bound)
        b = jax.random.uniform(kb, (1, fan_out), jnp.float32, -bound, bound)
        params.append((w, b))
    return params


def reference_forward(z, params):
    """Pure-JAX f32 reference (eval-mode dropout = identity) for correctness."""
    x = z.reshape(z.shape[0], 28 * 28).astype(jnp.float32)
    for i, (w, b) in enumerate(params):
        x = x @ w + b
        if i < 4:
            x = jnp.maximum(x, 0.0)
    return jax.nn.sigmoid(x)


if __name__ == "__main__":
    key = jax.random.PRNGKey(0)
    key, kz = jax.random.split(key)

    params = init_params(key)
    prepared = prepare_params(params)          # bf16 weight cast hoisted out of the forward

    B = 8
    z = jax.random.normal(kz, (B, 1, 28, 28), jnp.float32)   # NCHW input

    out = jax.block_until_ready(discriminator_forward(z, prepared))
    ref = reference_forward(z, params)

    assert out.shape == (B, 1)
    assert bool(jnp.all((out >= 0.0) & (out <= 1.0)))
    # bf16 matmuls vs f32 reference -> loosened tolerance.
    assert jnp.allclose(out, ref, atol=2e-2, rtol=2e-2), "mismatch vs pure-JAX reference"

    # Also exercise the multi-step (>=2 grid steps) path once, as used on v7x.
    B2 = 40
    key, kz2 = jax.random.split(key)
    z2 = jax.random.normal(kz2, (B2, 1, 28, 28), jnp.float32)
    out2 = jax.block_until_ready(discriminator_forward(z2, prepared))
    ref2 = reference_forward(z2, params)
    assert out2.shape == (B2, 1)
    assert jnp.allclose(out2, ref2, atol=2e-2, rtol=2e-2), "mismatch (multi-tile) vs reference"

    print("KERNEL_OK")
</pallas_src>

<mosaic_0001>
module attributes {stable_mosaic.version = 11 : i64} {
  func.func @discriminator_kernel(%arg0: i32, %arg1: memref<8x784xf32, #tpu.memory_space<vmem>>, %arg2: memref<784x512xbf16, #tpu.memory_space<vmem>>, %arg3: memref<1x512xf32, #tpu.memory_space<vmem>>, %arg4: memref<512x256xbf16, #tpu.memory_space<vmem>>, %arg5: memref<1x256xf32, #tpu.memory_space<vmem>>, %arg6: memref<256x128xbf16, #tpu.memory_space<vmem>>, %arg7: memref<1x128xf32, #tpu.memory_space<vmem>>, %arg8: memref<128x64xbf16, #tpu.memory_space<vmem>>, %arg9: memref<1x64xf32, #tpu.memory_space<vmem>>, %arg10: memref<1x64xf32, #tpu.memory_space<vmem>>, %arg11: memref<1x1xf32, #tpu.memory_space<vmem>>, %arg12: memref<8x1xf32, #tpu.memory_space<vmem>>) attributes {dimension_semantics = [#tpu.dimension_semantics<parallel>], iteration_bounds = array<i64: 1>, scalar_prefetch = 0 : i64, scratch_operands = 0 : i64, tpu.core_type = #tpu.core_type<tc>, window_params = [{transform_indices = @transform_0, window_bounds = array<i64: 8, 784>}, {pipeline_mode = #tpu.pipeline_mode<synchronous>, transform_indices = @transform_1, window_bounds = array<i64: 784, 512>}, {pipeline_mode = #tpu.pipeline_mode<synchronous>, transform_indices = @transform_2, window_bounds = array<i64: 1, 512>}, {pipeline_mode = #tpu.pipeline_mode<synchronous>, transform_indices = @transform_3, window_bounds = array<i64: 512, 256>}, {pipeline_mode = #tpu.pipeline_mode<synchronous>, transform_indices = @transform_4, window_bounds = array<i64: 1, 256>}, {pipeline_mode = #tpu.pipeline_mode<synchronous>, transform_indices = @transform_5, window_bounds = array<i64: 256, 128>}, {pipeline_mode = #tpu.pipeline_mode<synchronous>, transform_indices = @transform_6, window_bounds = array<i64: 1, 128>}, {pipeline_mode = #tpu.pipeline_mode<synchronous>, transform_indices = @transform_7, window_bounds = array<i64: 128, 64>}, {pipeline_mode = #tpu.pipeline_mode<synchronous>, transform_indices = @transform_8, window_bounds = array<i64: 1, 64>}, {pipeline_mode = #tpu.pipeline_mode<synchronous>, transform_indices = @transform_9, window_bounds = array<i64: 1, 64>}, {pipeline_mode = #tpu.pipeline_mode<synchronous>, transform_indices = @transform_10, window_bounds = array<i64: 1, 1>}, {transform_indices = @transform_11, window_bounds = array<i64: 8, 1>}]} {
    %c0 = arith.constant 0 : index
    %c0_0 = arith.constant 0 : index
    %0 = vector.load %arg1[%c0, %c0_0] : memref<8x784xf32, #tpu.memory_space<vmem>>, vector<8x784xf32>
    %1 = arith.truncf %0 : vector<8x784xf32> to vector<8x784xbf16>
    %c0_1 = arith.constant 0 : index
    %c0_2 = arith.constant 0 : index
    %2 = vector.load %arg2[%c0_1, %c0_2] : memref<784x512xbf16, #tpu.memory_space<vmem>>, vector<784x512xbf16>
    %cst = arith.constant dense<0.000000e+00> : vector<8x512xf32>
    %3 = tpu.matmul %1, %2, %cst {dimension_numbers = #tpu.dot_dimension_numbers<[1], [0], [0], [1], [0, 0, 1, 1], [], []>} : vector<8x784xbf16>, vector<784x512xbf16>, vector<8x512xf32> -> vector<8x512xf32>
    %c0_3 = arith.constant 0 : index
    %c0_4 = arith.constant 0 : index
    %4 = vector.load %arg3[%c0_3, %c0_4] : memref<1x512xf32, #tpu.memory_space<vmem>>, vector<1x512xf32>
    %5 = vector.broadcast %4 : vector<1x512xf32> to vector<8x512xf32>
    %6 = arith.addf %3, %5 : vector<8x512xf32>
    %cst_5 = arith.constant 0.000000e+00 : f32
    %7 = vector.broadcast %cst_5 : f32 to vector<8x512xf32>
    %8 = arith.maximumf %6, %7 : vector<8x512xf32>
    %9 = arith.truncf %8 : vector<8x512xf32> to vector<8x512xbf16>
    %c0_6 = arith.constant 0 : index
    %c0_7 = arith.constant 0 : index
    %10 = vector.load %arg4[%c0_6, %c0_7] : memref<512x256xbf16, #tpu.memory_space<vmem>>, vector<512x256xbf16>
    %cst_8 = arith.constant dense<0.000000e+00> : vector<8x256xf32>
    %11 = tpu.matmul %9, %10, %cst_8 {dimension_numbers = #tpu.dot_dimension_numbers<[1], [0], [0], [1], [0, 0, 1, 1], [], []>} : vector<8x512xbf16>, vector<512x256xbf16>, vector<8x256xf32> -> vector<8x256xf32>
    %c0_9 = arith.constant 0 : index
    %c0_10 = arith.constant 0 : index
    %12 = vector.load %arg5[%c0_9, %c0_10] : memref<1x256xf32, #tpu.memory_space<vmem>>, vector<1x256xf32>
    %13 = vector.broadcast %12 : vector<1x256xf32> to vector<8x256xf32>
    %14 = arith.addf %11, %13 : vector<8x256xf32>
    %cst_11 = arith.constant 0.000000e+00 : f32
    %15 = vector.broadcast %cst_11 : f32 to vector<8x256xf32>
    %16 = arith.maximumf %14, %15 : vector<8x256xf32>
    %17 = arith.truncf %16 : vector<8x256xf32> to vector<8x256xbf16>
    %c0_12 = arith.constant 0 : index
    %c0_13 = arith.constant 0 : index
    %18 = vector.load %arg6[%c0_12, %c0_13] : memref<256x128xbf16, #tpu.memory_space<vmem>>, vector<256x128xbf16>
    %cst_14 = arith.constant dense<0.000000e+00> : vector<8x128xf32>
    %19 = tpu.matmul %17, %18, %cst_14 {dimension_numbers = #tpu.dot_dimension_numbers<[1], [0], [0], [1], [0, 0, 1, 1], [], []>} : vector<8x256xbf16>, vector<256x128xbf16>, vector<8x128xf32> -> vector<8x128xf32>
    %c0_15 = arith.constant 0 : index
    %c0_16 = arith.constant 0 : index
    %20 = vector.load %arg7[%c0_15, %c0_16] : memref<1x128xf32, #tpu.memory_space<vmem>>, vector<1x128xf32>
    %21 = vector.broadcast %20 : vector<1x128xf32> to vector<8x128xf32>
    %22 = arith.addf %19, %21 : vector<8x128xf32>
    %cst_17 = arith.constant 0.000000e+00 : f32
    %23 = vector.broadcast %cst_17 : f32 to vector<8x128xf32>
    %24 = arith.maximumf %22, %23 : vector<8x128xf32>
    %25 = arith.truncf %24 : vector<8x128xf32> to vector<8x128xbf16>
    %c0_18 = arith.constant 0 : index
    %c0_19 = arith.constant 0 : index
    %26 = vector.load %arg8[%c0_18, %c0_19] : memref<128x64xbf16, #tpu.memory_space<vmem>>, vector<128x64xbf16>
    %cst_20 = arith.constant dense<0.000000e+00> : vector<8x64xf32>
    %27 = tpu.matmul %25, %26, %cst_20 {dimension_numbers = #tpu.dot_dimension_numbers<[1], [0], [0], [1], [0, 0, 1, 1], [], []>} : vector<8x128xbf16>, vector<128x64xbf16>, vector<8x64xf32> -> vector<8x64xf32>
    %c0_21 = arith.constant 0 : index
    %c0_22 = arith.constant 0 : index
    %28 = vector.load %arg9[%c0_21, %c0_22] : memref<1x64xf32, #tpu.memory_space<vmem>>, vector<1x64xf32>
    %29 = vector.broadcast %28 : vector<1x64xf32> to vector<8x64xf32>
    %30 = arith.addf %27, %29 : vector<8x64xf32>
    %cst_23 = arith.constant 0.000000e+00 : f32
    %31 = vector.broadcast %cst_23 : f32 to vector<8x64xf32>
    %32 = arith.maximumf %30, %31 : vector<8x64xf32>
    %c0_24 = arith.constant 0 : index
    %c0_25 = arith.constant 0 : index
    %33 = vector.load %arg10[%c0_24, %c0_25] : memref<1x64xf32, #tpu.memory_space<vmem>>, vector<1x64xf32>
    %34 = vector.broadcast %33 : vector<1x64xf32> to vector<8x64xf32>
    %35 = arith.mulf %32, %34 : vector<8x64xf32>
    %cst_26 = arith.constant dense<0.000000e+00> : vector<8xf32>
    %36 = vector.multi_reduction <add>, %35, %cst_26 [1] : vector<8x64xf32> to vector<8xf32>
    %37 = vector.shape_cast %36 : vector<8xf32> to vector<8x1xf32>
    %c0_27 = arith.constant 0 : index
    %c0_28 = arith.constant 0 : index
    %38 = vector.load %arg11[%c0_27, %c0_28] : memref<1x1xf32, #tpu.memory_space<vmem>>, vector<1x1xf32>
    %39 = vector.broadcast %38 : vector<1x1xf32> to vector<8x1xf32>
    %40 = arith.addf %37, %39 : vector<8x1xf32>
    %41 = arith.negf %40 : vector<8x1xf32>
    %42 = math.exp %41 : vector<8x1xf32>
    %cst_29 = arith.constant 1.000000e+00 : f32
    %43 = vector.broadcast %cst_29 : f32 to vector<8x1xf32>
    %44 = arith.addf %43, %42 : vector<8x1xf32>
    %45 = arith.divf %43, %44 : vector<8x1xf32>
    %c0_30 = arith.constant 0 : index
    %c0_31 = arith.constant 0 : index
    %46 = vector.load %arg12[%c0_30, %c0_31] : memref<8x1xf32, #tpu.memory_space<vmem>>, vector<8x1xf32>
    tpu.vector_store %arg12[%c0_30, %c0_31], %45 {strides = array<i32>} : memref<8x1xf32, #tpu.memory_space<vmem>>, vector<8x1xf32>,
    return
  }
  func.func @transform_0(%arg0: i32) -> (i32, i32) {
    %c0_i32 = arith.constant 0 : i32
    %c0_i32_0 = arith.constant 0 : i32
    return %arg0, %c0_i32 : i32, i32
  }
  func.func @transform_1(%arg0: i32) -> (i32, i32) {
    %c0_i32 = arith.constant 0 : i32
    %c0_i32_0 = arith.constant 0 : i32
    %c0_i32_1 = arith.constant 0 : i32
    return %c0_i32, %c0_i32_0 : i32, i32
  }
  func.func @transform_2(%arg0: i32) -> (i32, i32) {
    %c0_i32 = arith.constant 0 : i32
    %c0_i32_0 = arith.constant 0 : i32
    %c0_i32_1 = arith.constant 0 : i32
    return %c0_i32, %c0_i32_0 : i32, i32
  }
  func.func @transform_3(%arg0: i32) -> (i32, i32) {
    %c0_i32 = arith.constant 0 : i32
    %c0_i32_0 = arith.constant 0 : i32
    %c0_i32_1 = arith.constant 0 : i32
    return %c0_i32, %c0_i32_0 : i32, i32
  }
  func.func @transform_4(%arg0: i32) -> (i32, i32) {
    %c0_i32 = arith.constant 0 : i32
    %c0_i32_0 = arith.constant 0 : i32
    %c0_i32_1 = arith.constant 0 : i32
    return %c0_i32, %c0_i32_0 : i32, i32
  }
  func.func @transform_5(%arg0: i32) -> (i32, i32) {
    %c0_i32 = arith.constant 0 : i32
    %c0_i32_0 = arith.constant 0 : i32
    %c0_i32_1 = arith.constant 0 : i32
    return %c0_i32, %c0_i32_0 : i32, i32
  }
  func.func @transform_6(%arg0: i32) -> (i32, i32) {
    %c0_i32 = arith.constant 0 : i32
    %c0_i32_0 = arith.constant 0 : i32
    %c0_i32_1 = arith.constant 0 : i32
    return %c0_i32, %c0_i32_0 : i32, i32
  }
  func.func @transform_7(%arg0: i32) -> (i32, i32) {
    %c0_i32 = arith.constant 0 : i32
    %c0_i32_0 = arith.constant 0 : i32
    %c0_i32_1 = arith.constant 0 : i32
    return %c0_i32, %c0_i32_0 : i32, i32
  }
  func.func @transform_8(%arg0: i32) -> (i32, i32) {
    %c0_i32 = arith.constant 0 : i32
    %c0_i32_0 = arith.constant 0 : i32
    %c0_i32_1 = arith.constant 0 : i32
    return %c0_i32, %c0_i32_0 : i32, i32
  }
  func.func @transform_9(%arg0: i32) -> (i32, i32) {
    %c0_i32 = arith.constant 0 : i32
    %c0_i32_0 = arith.constant 0 : i32
    %c0_i32_1 = arith.constant 0 : i32
    return %c0_i32, %c0_i32_0 : i32, i32
  }
  func.func @transform_10(%arg0: i32) -> (i32, i32) {
    %c0_i32 = arith.constant 0 : i32
    %c0_i32_0 = arith.constant 0 : i32
    %c0_i32_1 = arith.constant 0 : i32
    return %c0_i32, %c0_i32_0 : i32, i32
  }
  func.func @transform_11(%arg0: i32) -> (i32, i32) {
    %c0_i32 = arith.constant 0 : i32
    %c0_i32_0 = arith.constant 0 : i32
    return %arg0, %c0_i32 : i32, i32
  }
}

</mosaic_0001>

<llo_original>
// kernel: tpu_custom_call.1
$region0: #{tpu_custom_call.1}
  #allocation0 [shape = 'u32[]', space=smem, size = 0x4, offset = 0x4, fixed_abs, tag = 'smem constant byte address 0x4 - core index']
  #allocation1 [shape = 'u32[144,128]{1,0:T(1,128)}', space=vmem, size = 0x12000, scoped, tag = 'internal scratch']
  #allocation2 [shape = 'f32[1,1]{1,0:T(1,128)S(1)}', space=vmem, size = 0x200, scoped, tag = 'scoped memory for tpu_custom_call.1']
  %s0 = inlined_call_operand.vmem [shape: f32[8,784], index: 0, kind: input, shape index: {}]
  %s1 = inlined_call_operand.hbm [shape: bf16[784,512], index: 1, kind: input, shape index: {}]
  %s2 = inlined_call_operand.vmem [shape: f32[1,512], index: 2, kind: input, shape index: {}]
  %s3 = inlined_call_operand.hbm [shape: bf16[512,256], index: 3, kind: input, shape index: {}]
  %s4 = inlined_call_operand.vmem [shape: f32[1,256], index: 4, kind: input, shape index: {}]
  %s5 = inlined_call_operand.hbm [shape: bf16[256,128], index: 5, kind: input, shape index: {}]
  %s6 = inlined_call_operand.vmem [shape: f32[1,128], index: 6, kind: input, shape index: {}]
  %s7 = inlined_call_operand.vmem [shape: bf16[128,64], index: 7, kind: input, shape index: {}]
  %s8 = inlined_call_operand.vmem [shape: f32[1,64], index: 8, kind: input, shape index: {}]
  %s9 = inlined_call_operand.vmem [shape: f32[1,64], index: 9, kind: input, shape index: {}]
  %s10 = inlined_call_operand.<no memory space> [shape: f32[1,1], index: 10, kind: input, shape index: {}]
  %s11 = inlined_call_operand.vmem [shape: f32[8,1], index: 11, kind: output, shape index: {}]
  %s12 = sld [smem:[#allocation0]]
  $region66: #{tpu_custom_call.1} parent=0
    _
  %s14 = ssub.s32 1, %s12
  %s15 = scalar_select 0, %s14, %s12
  %v16 = vstv %s10
  %17 = vst [vmem:[#allocation2] sm:$0x1] %v16
  $region1: #{tpu_custom_call.1} parent=0
    #allocation3 [shape = 'u8[802816]{0}', space=vmem, size = 0xc4000, scoped, tag = 'input window, operand 1, single buffered']
    #allocation4 [shape = 's32[1]{0}', space=sflag, size = 0x4, scoped, tag = 'scoped memory for tpu_custom_call.1']
    #allocation5 [shape = 'u8[262144]{0}', space=vmem, size = 0x40000, scoped, tag = 'input window, operand 3, single buffered']
    #allocation6 [shape = 's32[1]{0}', space=sflag, size = 0x4, scoped, tag = 'scoped memory for tpu_custom_call.1']
    #allocation7 [shape = 'u8[65536]{0}', space=vmem, size = 0x10000, scoped, tag = 'input window, operand 5, single buffered']
    %18 = vsyncpa [#allocation4], 0
    %19 = vsyncpa [#allocation6], 0
    // Predicated region
    $region2: #{tpu_custom_call.1} parent=1 // pred_check
      _
    $region3: #{tpu_custom_call.1} parent=1 // pred_check_branch
      %21 = sbr.rel (0) target = $region5
    $region4: #{tpu_custom_call.1} parent=1 // pred_region
      _
    $region5: #{tpu_custom_call.1} parent=1 // pred_fallthru
      _
    // Predicated region
    $region6: #{tpu_custom_call.1} parent=1 // pred_check
      _
    $region7: #{tpu_custom_call.1} parent=1 // pred_check_branch
      %23 = sbr.rel (0) target = $region9
    $region8: #{tpu_custom_call.1} parent=1 // pred_region
      %s25 = ssub.s32 25088, 25088
      %26 = vsyncadd [#allocation4], %s25
      %s27 = sshll.u32 [#allocation3], 4
      %s28 = int_to_ptr.vmem [resolvable:$true] %s27
      %33 = dma.hbm_to_vmem [thread:$0]  %s1, 25088, %s28, [#allocation4], 256, 256, 16
    $region9: #{tpu_custom_call.1} parent=1 // pred_fallthru
      _
    // Predicated region
    $region10: #{tpu_custom_call.1} parent=1 // pred_check
      _
    $region11: #{tpu_custom_call.1} parent=1 // pred_check_branch
      %35 = sbr.rel (0) target = $region13
    $region12: #{tpu_custom_call.1} parent=1 // pred_region
      _
    $region13: #{tpu_custom_call.1} parent=1 // pred_fallthru
      _
    // Predicated region
    $region14: #{tpu_custom_call.1} parent=1 // pred_check
      _
    $region15: #{tpu_custom_call.1} parent=1 // pred_check_branch
      %37 = sbr.rel (0) target = $region17
    $region16: #{tpu_custom_call.1} parent=1 // pred_region
      %s39 = ssub.s32 8192, 8192
      %40 = vsyncadd [#allocation6], %s39
      %s41 = sshll.u32 [#allocation5], 4
      %s42 = int_to_ptr.vmem [resolvable:$true] %s41
      %47 = dma.hbm_to_vmem [thread:$0]  %s3, 8192, %s42, [#allocation6], 128, 128, 8
    $region17: #{tpu_custom_call.1} parent=1 // pred_fallthru
      _
    // Predicated region
    $region18: #{tpu_custom_call.1} parent=1 // pred_check
      _
    $region19: #{tpu_custom_call.1} parent=1 // pred_check_branch
      %49 = sbr.rel (0) target = $region21
    $region20: #{tpu_custom_call.1} parent=1 // pred_region
      _
    $region21: #{tpu_custom_call.1} parent=1 // pred_fallthru
      _
    // Predicated region
    $region22: #{tpu_custom_call.1} parent=1 // pred_check
      _
    $region23: #{tpu_custom_call.1} parent=1 // pred_check_branch
      %51 = sbr.rel (0) target = $region25
    $region24: #{tpu_custom_call.1} parent=1 // pred_region
      %s53 = ssub.s32 2048, 2048
      %54 = vsyncadd [#allocation6], %s53
      %s55 = sshll.u32 [#allocation7], 4
      %s56 = int_to_ptr.vmem [resolvable:$true] %s55
      %61 = dma.hbm_to_vmem [thread:$0]  %s5, 2048, %s56, [#allocation6], 64, 64, 4
    $region25: #{tpu_custom_call.1} parent=1 // pred_fallthru
      _
    // Predicated region
    $region26: #{tpu_custom_call.1} parent=1 // pred_check
      _
    $region27: #{tpu_custom_call.1} parent=1 // pred_check_branch
      %63 = sbr.rel (0) target = $region29
    $region28: #{tpu_custom_call.1} parent=1 // pred_region
      _
    $region29: #{tpu_custom_call.1} parent=1 // pred_fallthru
      _
    // Predicated region
    $region30: #{tpu_custom_call.1} parent=1 // pred_check
      _
    $region31: #{tpu_custom_call.1} parent=1 // pred_check_branch
      %65 = sbr.rel (0) target = $region33
    $region32: #{tpu_custom_call.1} parent=1 // pred_region
      _
    $region33: #{tpu_custom_call.1} parent=1 // pred_fallthru
      _
    // Predicated region
    $region34: #{tpu_custom_call.1} parent=1 // pred_check
      _
    $region35: #{tpu_custom_call.1} parent=1 // pred_check_branch
      %67 = sbr.rel (0) target = $region37
    $region36: #{tpu_custom_call.1} parent=1 // pred_region
      _
    $region37: #{tpu_custom_call.1} parent=1 // pred_fallthru
      _
    // Predicated region
    $region38: #{tpu_custom_call.1} parent=1 // pred_check
      _
    $region39: #{tpu_custom_call.1} parent=1 // pred_check_branch
      %69 = sbr.rel (0) target = $region41
    $region40: #{tpu_custom_call.1} parent=1 // pred_region
      _
    $region41: #{tpu_custom_call.1} parent=1 // pred_fallthru
      _
    // Predicated region
    $region42: #{tpu_custom_call.1} parent=1 // pred_check
      _
    $region43: #{tpu_custom_call.1} parent=1 // pred_check_branch
      %71 = sbr.rel (0) target = $region45
    $region44: #{tpu_custom_call.1} parent=1 // pred_region
      _
    $region45: #{tpu_custom_call.1} parent=1 // pred_fallthru
      _
    // Predicated region
    $region46: #{tpu_custom_call.1} parent=1 // pred_check
      _
    $region47: #{tpu_custom_call.1} parent=1 // pred_check_branch
      %73 = sbr.rel (0) target = $region49
    $region48: #{tpu_custom_call.1} parent=1 // pred_region
      %74 = dma.done [#allocation4], 25088
    $region49: #{tpu_custom_call.1} parent=1 // pred_fallthru
      _
    // Predicated region
    $region50: #{tpu_custom_call.1} parent=1 // pred_check
      _
    $region51: #{tpu_custom_call.1} parent=1 // pred_check_branch
      %76 = sbr.rel (0) target = $region53
    $region52: #{tpu_custom_call.1} parent=1 // pred_region
      %77 = dma.done [#allocation6], 8192
    $region53: #{tpu_custom_call.1} parent=1 // pred_fallthru
      _
    // Predicated region
    $region54: #{tpu_custom_call.1} parent=1 // pred_check
      _
    $region55: #{tpu_custom_call.1} parent=1 // pred_check_branch
      %79 = sbr.rel (0) target = $region57
    $region56: #{tpu_custom_call.1} parent=1 // pred_region
      %80 = dma.done [#allocation6], 2048
    $region57: #{tpu_custom_call.1} parent=1 // pred_fallthru
      _
    %v82 = vld [vmem:[%s0] sm:$0xff]
    %v83 = vld [vmem:[%s0 + $0x8] sm:$0xff]
    %v84 = vld [vmem:[%s0 + $0x10] sm:$0xff]
    %v85 = vld [vmem:[%s0 + $0x18] sm:$0xff]
    %v86 = vld [vmem:[%s0 + $0x20] sm:$0xff]
    %v87 = vld [vmem:[%s0 + $0x28] sm:$0xff]
    %v88 = vld [vmem:[%s0 + $0x30] sm:$0xff]
    %v89 = vpack.c.bf16 %v82, %v82
    %v90 = vpack.c.bf16 %v83, %v83
    %v91 = vpack.c.bf16 %v84, %v84
    %v92 = vpack.c.bf16 %v85, %v85
    %v93 = vpack.c.bf16 %v86, %v86
    %v94 = vpack.c.bf16 %v87, %v87
    %v95 = vpack.c.bf16 %v88, %v88
    %v96 = vld [vmem:[#allocation3] sm:$0xff]
    %v97 = vld [vmem:[#allocation3 + $0x8] sm:$0xff]
    %v98 = vld [vmem:[#allocation3 + $0x10] sm:$0xff]
    %v99 = vld [vmem:[#allocation3 + $0x18] sm:$0xff]
    %v100 = vld [vmem:[#allocation3 + $0x20] sm:$0xff]
    %v101 = vld [vmem:[#allocation3 + $0x28] sm:$0xff]
    %v102 = vld [vmem:[#allocation3 + $0x30] sm:$0xff]
    %v103 = vld [vmem:[#allocation3 + $0x38] sm:$0xff]
    %v104 = vld [vmem:[#allocation3 + $0x40] sm:$0xff]
    %v105 = vld [vmem:[#allocation3 + $0x48] sm:$0xff]
    %v106 = vld [vmem:[#allocation3 + $0x50] sm:$0xff]
    %v107 = vld [vmem:[#allocation3 + $0x58] sm:$0xff]
    %v108 = vld [vmem:[#allocation3 + $0x60] sm:$0xff]
    %v109 = vld [vmem:[#allocation3 + $0x68] sm:$0xff]
    %v110 = vld [vmem:[#allocation3 + $0x70] sm:$0xff]
    %v111 = vld [vmem:[#allocation3 + $0x78] sm:$0xff]
    %v112 = vld [vmem:[#allocation3 + $0x80] sm:$0xff]
    %v113 = vld [vmem:[#allocation3 + $0x88] sm:$0xff]
    %v114 = vld [vmem:[#allocation3 + $0x90] sm:$0xff]
    %v115 = vld [vmem:[#allocation3 + $0x98] sm:$0xff]
    %v116 = vld [vmem:[#allocation3 + $0xa0] sm:$0xff]
    %v117 = vld [vmem:[#allocation3 + $0xa8] sm:$0xff]
    %v118 = vld [vmem:[#allocation3 + $0xb0] sm:$0xff]
    %v119 = vld [vmem:[#allocation3 + $0xb8] sm:$0xff]
    %v120 = vld [vmem:[#allocation3 + $0xc0] sm:$0xff]
    %v121 = vld [vmem:[#allocation3 + $0xc8] sm:$0xff]
    %v122 = vld [vmem:[#allocation3 + $0xd0] sm:$0xff]
    %v123 = vld [vmem:[#allocation3 + $0xd8] sm:$0xff]
    %v124 = vld [vmem:[#allocation3 + $0xe0] sm:$0xff]
    %v125 = vld [vmem:[#allocation3 + $0xe8] sm:$0xff]
    %v126 = vld [vmem:[#allocation3 + $0xf0] sm:$0xff]
    %v127 = vld [vmem:[#allocation3 + $0xf8] sm:$0xff]
    %v128 = vld [vmem:[#allocation3 + $0x100] sm:$0xff]
    %v129 = vld [vmem:[#allocation3 + $0x108] sm:$0xff]
    %v130 = vld [vmem:[#allocation3 + $0x110] sm:$0xff]
    %v131 = vld [vmem:[#allocation3 + $0x118] sm:$0xff]
    %v132 = vld [vmem:[#allocation3 + $0x120] sm:$0xff]
    %v133 = vld [vmem:[#allocation3 + $0x128] sm:$0xff]
    %v134 = vld [vmem:[#allocation3 + $0x130] sm:$0xff]
    %v135 = vld [vmem:[#allocation3 + $0x138] sm:$0xff]
    %v136 = vld [vmem:[#allocation3 + $0x140] sm:$0xff]
    %v137 = vld [vmem:[#allocation3 + $0x148] sm:$0xff]
    %v138 = vld [vmem:[#allocation3 + $0x150] sm:$0xff]
    %v139 = vld [vmem:[#allocation3 + $0x158] sm:$0xff]
    %v140 = vld [vmem:[#allocation3 + $0x160] sm:$0xff]
    %v141 = vld [vmem:[#allocation3 + $0x168] sm:$0xff]
    %v142 = vld [vmem:[#allocation3 + $0x170] sm:$0xff]
    %v143 = vld [vmem:[#allocation3 + $0x178] sm:$0xff]
    %v144 = vld [vmem:[#allocation3 + $0x180] sm:$0xff]
    %v145 = vld [vmem:[#allocation3 + $0x188] sm:$0xff]
    %v146 = vld [vmem:[#allocation3 + $0x190] sm:$0xff]
    %v147 = vld [vmem:[#allocation3 + $0x198] sm:$0xff]
    %v148 = vld [vmem:[#allocation3 + $0x1a0] sm:$0xff]
    %v149 = vld [vmem:[#allocation3 + $0x1a8] sm:$0xff]
    %v150 = vld [vmem:[#allocation3 + $0x1b0] sm:$0xff]
    %v151 = vld [vmem:[#allocation3 + $0x1b8] sm:$0xff]
    %v152 = vld [vmem:[#allocation3 + $0x1c0] sm:$0xff]
    %v153 = vld [vmem:[#allocation3 + $0x1c8] sm:$0xff]
    %v154 = vld [vmem:[#allocation3 + $0x1d0] sm:$0xff]
    %v155 = vld [vmem:[#allocation3 + $0x1d8] sm:$0xff]
    %v156 = vld [vmem:[#allocation3 + $0x1e0] sm:$0xff]
    %v157 = vld [vmem:[#allocation3 + $0x1e8] sm:$0xff]
    %v158 = vld [vmem:[#allocation3 + $0x1f0] sm:$0xff]
    %v159 = vld [vmem:[#allocation3 + $0x1f8] sm:$0xff]
    %v160 = vld [vmem:[#allocation3 + $0x200] sm:$0xff]
    %v161 = vld [vmem:[#allocation3 + $0x208] sm:$0xff]
    %v162 = vld [vmem:[#allocation3 + $0x210] sm:$0xff]
    %v163 = vld [vmem:[#allocation3 + $0x218] sm:$0xff]
    %v164 = vld [vmem:[#allocation3 + $0x220] sm:$0xff]
    %v165 = vld [vmem:[#allocation3 + $0x228] sm:$0xff]
    %v166 = vld [vmem:[#allocation3 + $0x230] sm:$0xff]
    %v167 = vld [vmem:[#allocation3 + $0x238] sm:$0xff]
    %v168 = vld [vmem:[#allocation3 + $0x240] sm:$0xff]
    %v169 = vld [vmem:[#allocation3 + $0x248] sm:$0xff]
    %v170 = vld [vmem:[#allocation3 + $0x250] sm:$0xff]
    %v171 = vld [vmem:[#allocation3 + $0x258] sm:$0xff]
    %v172 = vld [vmem:[#allocation3 + $0x260] sm:$0xff]
    %v173 = vld [vmem:[#allocation3 + $0x268] sm:$0xff]
    %v174 = vld [vmem:[#allocation3 + $0x270] sm:$0xff]
    %v175 = vld [vmem:[#allocation3 + $0x278] sm:$0xff]
    %v176 = vld [vmem:[#allocation3 + $0x280] sm:$0xff]
    %v177 = vld [vmem:[#allocation3 + $0x288] sm:$0xff]
    %v178 = vld [vmem:[#allocation3 + $0x290] sm:$0xff]
    %v179 = vld [vmem:[#allocation3 + $0x298] sm:$0xff]
    %v180 = vld [vmem:[#allocation3 + $0x2a0] sm:$0xff]
    %v181 = vld [vmem:[#allocation3 + $0x2a8] sm:$0xff]
    %v182 = vld [vmem:[#allocation3 + $0x2b0] sm:$0xff]
    %v183 = vld [vmem:[#allocation3 + $0x2b8] sm:$0xff]
    %v184 = vld [vmem:[#allocation3 + $0x2c0] sm:$0xff]
    %v185 = vld [vmem:[#allocation3 + $0x2c8] sm:$0xff]
    %v186 = vld [vmem:[#allocation3 + $0x2d0] sm:$0xff]
    %v187 = vld [vmem:[#allocation3 + $0x2d8] sm:$0xff]
    %v188 = vld [vmem:[#allocation3 + $0x2e0] sm:$0xff]
    %v189 = vld [vmem:[#allocation3 + $0x2e8] sm:$0xff]
    %v190 = vld [vmem:[#allocation3 + $0x2f0] sm:$0xff]
    %v191 = vld [vmem:[#allocation3 + $0x2f8] sm:$0xff]
    %v192 = vld [vmem:[#allocation3 + $0x300] sm:$0xff]
    %v193 = vld [vmem:[#allocation3 + $0x308] sm:$0xff]
    %v194 = vld [vmem:[#allocation3 + $0x310] sm:$0xff]
    %v195 = vld [vmem:[#allocation3 + $0x318] sm:$0xff]
    %v196 = vld [vmem:[#allocation3 + $0x320] sm:$0xff]
    %v197 = vld [vmem:[#allocation3 + $0x328] sm:$0xff]
    %v198 = vld [vmem:[#allocation3 + $0x330] sm:$0xff]
    %v199 = vld [vmem:[#allocation3 + $0x338] sm:$0xff]
    %v200 = vld [vmem:[#allocation3 + $0x340] sm:$0xff]
    %v201 = vld [vmem:[#allocation3 + $0x348] sm:$0xff]
    %v202 = vld [vmem:[#allocation3 + $0x350] sm:$0xff]
    %v203 = vld [vmem:[#allocation3 + $0x358] sm:$0xff]
    %v204 = vld [vmem:[#allocation3 + $0x360] sm:$0xff]
    %v205 = vld [vmem:[#allocation3 + $0x368] sm:$0xff]
    %v206 = vld [vmem:[#allocation3 + $0x370] sm:$0xff]
    %v207 = vld [vmem:[#allocation3 + $0x378] sm:$0xff]
    %v208 = vld [vmem:[#allocation3 + $0x380] sm:$0xff]
    %v209 = vld [vmem:[#allocation3 + $0x388] sm:$0xff]
    %v210 = vld [vmem:[#allocation3 + $0x390] sm:$0xff]
    %v211 = vld [vmem:[#allocation3 + $0x398] sm:$0xff]
    %v212 = vld [vmem:[#allocation3 + $0x3a0] sm:$0xff]
    %v213 = vld [vmem:[#allocation3 + $0x3a8] sm:$0xff]
    %v214 = vld [vmem:[#allocation3 + $0x3b0] sm:$0xff]
    %v215 = vld [vmem:[#allocation3 + $0x3b8] sm:$0xff]
    %v216 = vld [vmem:[#allocation3 + $0x3c0] sm:$0xff]
    %v217 = vld [vmem:[#allocation3 + $0x3c8] sm:$0xff]
    %v218 = vld [vmem:[#allocation3 + $0x3d0] sm:$0xff]
    %v219 = vld [vmem:[#allocation3 + $0x3d8] sm:$0xff]
    %v220 = vld [vmem:[#allocation3 + $0x3e0] sm:$0xff]
    %v221 = vld [vmem:[#allocation3 + $0x3e8] sm:$0xff]
    %v222 = vld [vmem:[#allocation3 + $0x3f0] sm:$0xff]
    %v223 = vld [vmem:[#allocation3 + $0x3f8] sm:$0xff]
    %v224 = vld [vmem:[#allocation3 + $0x400] sm:$0xff]
    %v225 = vld [vmem:[#allocation3 + $0x408] sm:$0xff]
    %v226 = vld [vmem:[#allocation3 + $0x410] sm:$0xff]
    %v227 = vld [vmem:[#allocation3 + $0x418] sm:$0xff]
    %v228 = vld [vmem:[#allocation3 + $0x420] sm:$0xff]
    %v229 = vld [vmem:[#allocation3 + $0x428] sm:$0xff]
    %v230 = vld [vmem:[#allocation3 + $0x430] sm:$0xff]
    %v231 = vld [vmem:[#allocation3 + $0x438] sm:$0xff]
    %v232 = vld [vmem:[#allocation3 + $0x440] sm:$0xff]
    %v233 = vld [vmem:[#allocation3 + $0x448] sm:$0xff]
    %v234 = vld [vmem:[#allocation3 + $0x450] sm:$0xff]
    %v235 = vld [vmem:[#allocation3 + $0x458] sm:$0xff]
    %v236 = vld [vmem:[#allocation3 + $0x460] sm:$0xff]
    %v237 = vld [vmem:[#allocation3 + $0x468] sm:$0xff]
    %v238 = vld [vmem:[#allocation3 + $0x470] sm:$0xff]
    %v239 = vld [vmem:[#allocation3 + $0x478] sm:$0xff]
    %v240 = vld [vmem:[#allocation3 + $0x480] sm:$0xff]
    %v241 = vld [vmem:[#allocation3 + $0x488] sm:$0xff]
    %v242 = vld [vmem:[#allocation3 + $0x490] sm:$0xff]
    %v243 = vld [vmem:[#allocation3 + $0x498] sm:$0xff]
    %v244 = vld [vmem:[#allocation3 + $0x4a0] sm:$0xff]
    %v245 = vld [vmem:[#allocation3 + $0x4a8] sm:$0xff]
    %v246 = vld [vmem:[#allocation3 + $0x4b0] sm:$0xff]
    %v247 = vld [vmem:[#allocation3 + $0x4b8] sm:$0xff]
    %v248 = vld [vmem:[#allocation3 + $0x4c0] sm:$0xff]
    %v249 = vld [vmem:[#allocation3 + $0x4c8] sm:$0xff]
    %v250 = vld [vmem:[#allocation3 + $0x4d0] sm:$0xff]
    %v251 = vld [vmem:[#allocation3 + $0x4d8] sm:$0xff]
    %v252 = vld [vmem:[#allocation3 + $0x4e0] sm:$0xff]
    %v253 = vld [vmem:[#allocation3 + $0x4e8] sm:$0xff]
    %v254 = vld [vmem:[#allocation3 + $0x4f0] sm:$0xff]
    %v255 = vld [vmem:[#allocation3 + $0x4f8] sm:$0xff]
    %v256 = vld [vmem:[#allocation3 + $0x500] sm:$0xff]
    %v257 = vld [vmem:[#allocation3 + $0x508] sm:$0xff]
    %v258 = vld [vmem:[#allocation3 + $0x510] sm:$0xff]
    %v259 = vld [vmem:[#allocation3 + $0x518] sm:$0xff]
    %v260 = vld [vmem:[#allocation3 + $0x520] sm:$0xff]
    %v261 = vld [vmem:[#allocation3 + $0x528] sm:$0xff]
    %v262 = vld [vmem:[#allocation3 + $0x530] sm:$0xff]
    %v263 = vld [vmem:[#allocation3 + $0x538] sm:$0xff]
    %v264 = vld [vmem:[#allocation3 + $0x540] sm:$0xff]
    %v265 = vld [vmem:[#allocation3 + $0x548] sm:$0xff]
    %v266 = vld [vmem:[#allocation3 + $0x550] sm:$0xff]
    %v267 = vld [vmem:[#allocation3 + $0x558] sm:$0xff]
    %v268 = vld [vmem:[#allocation3 + $0x560] sm:$0xff]
    %v269 = vld [vmem:[#allocation3 + $0x568] sm:$0xff]
    %v270 = vld [vmem:[#allocation3 + $0x570] sm:$0xff]
    %v271 = vld [vmem:[#allocation3 + $0x578] sm:$0xff]
    %v272 = vld [vmem:[#allocation3 + $0x580] sm:$0xff]
    %v273 = vld [vmem:[#allocation3 + $0x588] sm:$0xff]
    %v274 = vld [vmem:[#allocation3 + $0x590] sm:$0xff]
    %v275 = vld [vmem:[#allocation3 + $0x598] sm:$0xff]
    %v276 = vld [vmem:[#allocation3 + $0x5a0] sm:$0xff]
    %v277 = vld [vmem:[#allocation3 + $0x5a8] sm:$0xff]
    %v278 = vld [vmem:[#allocation3 + $0x5b0] sm:$0xff]
    %v279 = vld [vmem:[#allocation3 + $0x5b8] sm:$0xff]
    %v280 = vld [vmem:[#allocation3 + $0x5c0] sm:$0xff]
    %v281 = vld [vmem:[#allocation3 + $0x5c8] sm:$0xff]
    %v282 = vld [vmem:[#allocation3 + $0x5d0] sm:$0xff]
    %v283 = vld [vmem:[#allocation3 + $0x5d8] sm:$0xff]
    %v284 = vld [vmem:[#allocation3 + $0x5e0] sm:$0xff]
    %v285 = vld [vmem:[#allocation3 + $0x5e8] sm:$0xff]
    %v286 = vld [vmem:[#allocation3 + $0x5f0] sm:$0xff]
    %v287 = vld [vmem:[#allocation3 + $0x5f8] sm:$0xff]
    %v288 = vld [vmem:[#allocation3 + $0x600] sm:$0xff]
    %v289 = vld [vmem:[#allocation3 + $0x608] sm:$0xff]
    %v290 = vld [vmem:[#allocation3 + $0x610] sm:$0xff]
    %v291 = vld [vmem:[#allocation3 + $0x618] sm:$0xff]
    %v292 = vld [vmem:[%s2] sm:$0xf]
    %v294 = vlaneseq
    %v295 = vshrl.u32 %v294, 7
    %v296 = vsub.s32 0, %v295
    %v297 = vrot.slane %v292, %v296
    %v298 = vlaneseq
    %v299 = vshrl.u32 %v298, 7
    %v300 = vsub.s32 1, %v299
    %v301 = vrot.slane %v292, %v300
    %v302 = vlaneseq
    %v303 = vshrl.u32 %v302, 7
    %v304 = vsub.s32 2, %v303
    %v305 = vrot.slane %v292, %v304
    %v306 = vlaneseq
    %v307 = vshrl.u32 %v306, 7
    %v308 = vsub.s32 3, %v307
    %v309 = vrot.slane %v292, %v308
    %v510 = vunpack.c.l.b16 %v96
    %v511 = vunpack.c.h.b16 %v96
    %v512 = vunpack.c.l.b16 %v97
    %v513 = vunpack.c.h.b16 %v97
    %v514 = vunpack.c.l.b16 %v98
    %v515 = vunpack.c.h.b16 %v98
    %v516 = vunpack.c.l.b16 %v99
    %v517 = vunpack.c.h.b16 %v99
    %v518 = vunpack.c.l.b16 %v100
    %v519 = vunpack.c.h.b16 %v100
    %v520 = vunpack.c.l.b16 %v101
    %v521 = vunpack.c.h.b16 %v101
    %v522 = vunpack.c.l.b16 %v102
    %v523 = vunpack.c.h.b16 %v102
    %v524 = vunpack.c.l.b16 %v103
    %v525 = vunpack.c.h.b16 %v103
    %v526 = vunpack.c.l.b16 %v104
    %v527 = vunpack.c.h.b16 %v104
    %v528 = vunpack.c.l.b16 %v105
    %v529 = vunpack.c.h.b16 %v105
    %v530 = vunpack.c.l.b16 %v106
    %v531 = vunpack.c.h.b16 %v106
    %v532 = vunpack.c.l.b16 %v107
    %v533 = vunpack.c.h.b16 %v107
    %v534 = vunpack.c.l.b16 %v108
    %v535 = vunpack.c.h.b16 %v108
    %v536 = vunpack.c.l.b16 %v109
    %v537 = vunpack.c.h.b16 %v109
    %v538 = vunpack.c.l.b16 %v110
    %v539 = vunpack.c.h.b16 %v110
    %v540 = vunpack.c.l.b16 %v111
    %v541 = vunpack.c.h.b16 %v111
    %v542 = vunpack.c.l.b16 %v112
    %v543 = vunpack.c.h.b16 %v112
    %v544 = vunpack.c.l.b16 %v113
    %v545 = vunpack.c.h.b16 %v113
    %v546 = vunpack.c.l.b16 %v114
    %v547 = vunpack.c.h.b16 %v114
    %v548 = vunpack.c.l.b16 %v115
    %v549 = vunpack.c.h.b16 %v115
    %v550 = vunpack.c.l.b16 %v116
    %v551 = vunpack.c.h.b16 %v116
    %v552 = vunpack.c.l.b16 %v117
    %v553 = vunpack.c.h.b16 %v117
    %v554 = vunpack.c.l.b16 %v118
    %v555 = vunpack.c.h.b16 %v118
    %v556 = vunpack.c.l.b16 %v119
    %v557 = vunpack.c.h.b16 %v119
    %v558 = vunpack.c.l.b16 %v120
    %v559 = vunpack.c.h.b16 %v120
    %v560 = vunpack.c.l.b16 %v121
    %v561 = vunpack.c.h.b16 %v121
    %v562 = vunpack.c.l.b16 %v122
    %v563 = vunpack.c.h.b16 %v122
    %v564 = vunpack.c.l.b16 %v123
    %v565 = vunpack.c.h.b16 %v123
    %v566 = vunpack.c.l.b16 %v124
    %v567 = vunpack.c.h.b16 %v124
    %v568 = vunpack.c.l.b16 %v125
    %v569 = vunpack.c.h.b16 %v125
    %v570 = vunpack.c.l.b16 %v126
    %v571 = vunpack.c.h.b16 %v126
    %v572 = vunpack.c.l.b16 %v127
    %v573 = vunpack.c.h.b16 %v127
    %v574 = vunpack.c.l.b16 %v128
    %v575 = vunpack.c.h.b16 %v128
    %v576 = vunpack.c.l.b16 %v129
    %v577 = vunpack.c.h.b16 %v129
    %v578 = vunpack.c.l.b16 %v130
    %v579 = vunpack.c.h.b16 %v130
    %v580 = vunpack.c.l.b16 %v131
    %v581 = vunpack.c.h.b16 %v131
    %v582 = vunpack.c.l.b16 %v132
    %v583 = vunpack.c.h.b16 %v132
    %v584 = vunpack.c.l.b16 %v133
    %v585 = vunpack.c.h.b16 %v133
    %v586 = vunpack.c.l.b16 %v134
    %v587 = vunpack.c.h.b16 %v134
    %v588 = vunpack.c.l.b16 %v135
    %v589 = vunpack.c.h.b16 %v135
    %v590 = vunpack.c.l.b16 %v136
    %v591 = vunpack.c.h.b16 %v136
    %v592 = vunpack.c.l.b16 %v137
    %v593 = vunpack.c.h.b16 %v137
    %v594 = vunpack.c.l.b16 %v138
    %v595 = vunpack.c.h.b16 %v138
    %v596 = vunpack.c.l.b16 %v139
    %v597 = vunpack.c.h.b16 %v139
    %v598 = vunpack.c.l.b16 %v140
    %v599 = vunpack.c.h.b16 %v140
    %v600 = vunpack.c.l.b16 %v141
    %v601 = vunpack.c.h.b16 %v141
    %v602 = vunpack.c.l.b16 %v142
    %v603 = vunpack.c.h.b16 %v142
    %v604 = vunpack.c.l.b16 %v143
    %v605 = vunpack.c.h.b16 %v143
    %v606 = vunpack.c.l.b16 %v144
    %v607 = vunpack.c.h.b16 %v144
    %v608 = vunpack.c.l.b16 %v145
    %v609 = vunpack.c.h.b16 %v145
    %v610 = vunpack.c.l.b16 %v146
    %v611 = vunpack.c.h.b16 %v146
    %v612 = vunpack.c.l.b16 %v147
    %v613 = vunpack.c.h.b16 %v147
    %v614 = vunpack.c.l.b16 %v148
    %v615 = vunpack.c.h.b16 %v148
    %v616 = vunpack.c.l.b16 %v149
    %v617 = vunpack.c.h.b16 %v149
    %v618 = vunpack.c.l.b16 %v150
    %v619 = vunpack.c.h.b16 %v150
    %v620 = vunpack.c.l.b16 %v151
    %v621 = vunpack.c.h.b16 %v151
    %v622 = vunpack.c.l.b16 %v152
    %v623 = vunpack.c.h.b16 %v152
    %v624 = vunpack.c.l.b16 %v153
    %v625 = vunpack.c.h.b16 %v153
    %v626 = vunpack.c.l.b16 %v154
    %v627 = vunpack.c.h.b16 %v154
    %v628 = vunpack.c.l.b16 %v155
    %v629 = vunpack.c.h.b16 %v155
    %v630 = vunpack.c.l.b16 %v156
    %v631 = vunpack.c.h.b16 %v156
    %v632 = vunpack.c.l.b16 %v157
    %v633 = vunpack.c.h.b16 %v157
    %v634 = vunpack.c.l.b16 %v158
    %v635 = vunpack.c.h.b16 %v158
    %v636 = vunpack.c.l.b16 %v159
    %v637 = vunpack.c.h.b16 %v159
    %v638 = vunpack.c.l.b16 %v160
    %v639 = vunpack.c.h.b16 %v160
    %v640 = vunpack.c.l.b16 %v161
    %v641 = vunpack.c.h.b16 %v161
    %v642 = vunpack.c.l.b16 %v162
    %v643 = vunpack.c.h.b16 %v162
    %v644 = vunpack.c.l.b16 %v163
    %v645 = vunpack.c.h.b16 %v163
    %v646 = vunpack.c.l.b16 %v164
    %v647 = vunpack.c.h.b16 %v164
    %v648 = vunpack.c.l.b16 %v165
    %v649 = vunpack.c.h.b16 %v165
    %v650 = vunpack.c.l.b16 %v166
    %v651 = vunpack.c.h.b16 %v166
    %v652 = vunpack.c.l.b16 %v167
    %v653 = vunpack.c.h.b16 %v167
    %v654 = vunpack.c.l.b16 %v168
    %v655 = vunpack.c.h.b16 %v168
    %v656 = vunpack.c.l.b16 %v169
    %v657 = vunpack.c.h.b16 %v169
    %v658 = vunpack.c.l.b16 %v170
    %v659 = vunpack.c.h.b16 %v170
    %v660 = vunpack.c.l.b16 %v171
    %v661 = vunpack.c.h.b16 %v171
    %v662 = vunpack.c.l.b16 %v172
    %v663 = vunpack.c.h.b16 %v172
    %v664 = vunpack.c.l.b16 %v173
    %v665 = vunpack.c.h.b16 %v173
    %v666 = vunpack.c.l.b16 %v174
    %v667 = vunpack.c.h.b16 %v174
    %v668 = vunpack.c.l.b16 %v175
    %v669 = vunpack.c.h.b16 %v175
    %v670 = vunpack.c.l.b16 %v176
    %v671 = vunpack.c.h.b16 %v176
    %v672 = vunpack.c.l.b16 %v177
    %v673 = vunpack.c.h.b16 %v177
    %v674 = vunpack.c.l.b16 %v178
    %v675 = vunpack.c.h.b16 %v178
    %v676 = vunpack.c.l.b16 %v179
    %v677 = vunpack.c.h.b16 %v179
    %v678 = vunpack.c.l.b16 %v180
    %v679 = vunpack.c.h.b16 %v180
    %v680 = vunpack.c.l.b16 %v181
    %v681 = vunpack.c.h.b16 %v181
    %v682 = vunpack.c.l.b16 %v182
    %v683 = vunpack.c.h.b16 %v182
    %v684 = vunpack.c.l.b16 %v183
    %v685 = vunpack.c.h.b16 %v183
    %v686 = vunpack.c.l.b16 %v184
    %v687 = vunpack.c.h.b16 %v184
    %v688 = vunpack.c.l.b16 %v185
    %v689 = vunpack.c.h.b16 %v185
    %v690 = vunpack.c.l.b16 %v186
    %v691 = vunpack.c.h.b16 %v186
    %v692 = vunpack.c.l.b16 %v187
    %v693 = vunpack.c.h.b16 %v187
    %v694 = vunpack.c.l.b16 %v188
    %v695 = vunpack.c.h.b16 %v188
    %v696 = vunpack.c.l.b16 %v189
    %v697 = vunpack.c.h.b16 %v189
    %v698 = vunpack.c.l.b16 %v190
    %v699 = vunpack.c.h.b16 %v190
    %v700 = vunpack.c.l.b16 %v191
    %v701 = vunpack.c.h.b16 %v191
    %v702 = vunpack.c.l.b16 %v192
    %v703 = vunpack.c.h.b16 %v192
    %v704 = vunpack.c.l.b16 %v193
    %v705 = vunpack.c.h.b16 %v193
    %v706 = vunpack.c.l.b16 %v194
    %v707 = vunpack.c.h.b16 %v194
    %v708 = vunpack.c.l.b16 %v195
    %v709 = vunpack.c.h.b16 %v195
    %v710 = vunpack.c.l.b16 %v196
    %v711 = vunpack.c.h.b16 %v196
    %v712 = vunpack.c.l.b16 %v197
    %v713 = vunpack.c.h.b16 %v197
    %v714 = vunpack.c.l.b16 %v198
    %v715 = vunpack.c.h.b16 %v198
    %v716 = vunpack.c.l.b16 %v199
    %v717 = vunpack.c.h.b16 %v199
    %v718 = vunpack.c.l.b16 %v200
    %v719 = vunpack.c.h.b16 %v200
    %v720 = vunpack.c.l.b16 %v201
    %v721 = vunpack.c.h.b16 %v201
    %v722 = vunpack.c.l.b16 %v202
    %v723 = vunpack.c.h.b16 %v202
    %v724 = vunpack.c.l.b16 %v203
    %v725 = vunpack.c.h.b16 %v203
    %v726 = vunpack.c.l.b16 %v204
    %v727 = vunpack.c.h.b16 %v204
    %v728 = vunpack.c.l.b16 %v205
    %v729 = vunpack.c.h.b16 %v205
    %v730 = vunpack.c.l.b16 %v206
    %v731 = vunpack.c.h.b16 %v206
    %v732 = vunpack.c.l.b16 %v207
    %v733 = vunpack.c.h.b16 %v207
    %v734 = vunpack.c.l.b16 %v208
    %v735 = vunpack.c.h.b16 %v208
    %v736 = vunpack.c.l.b16 %v209
    %v737 = vunpack.c.h.b16 %v209
    %v738 = vunpack.c.l.b16 %v210
    %v739 = vunpack.c.h.b16 %v210
    %v740 = vunpack.c.l.b16 %v211
    %v741 = vunpack.c.h.b16 %v211
    %v742 = vunpack.c.l.b16 %v212
    %v743 = vunpack.c.h.b16 %v212
    %v744 = vunpack.c.l.b16 %v213
    %v745 = vunpack.c.h.b16 %v213
    %v746 = vunpack.c.l.b16 %v214
    %v747 = vunpack.c.h.b16 %v214
    %v748 = vunpack.c.l.b16 %v215
    %v749 = vunpack.c.h.b16 %v215
    %v750 = vunpack.c.l.b16 %v216
    %v751 = vunpack.c.h.b16 %v216
    %v752 = vunpack.c.l.b16 %v217
    %v753 = vunpack.c.h.b16 %v217
    %v754 = vunpack.c.l.b16 %v218
    %v755 = vunpack.c.h.b16 %v218
    %v756 = vunpack.c.l.b16 %v219
    %v757 = vunpack.c.h.b16 %v219
    %v758 = vunpack.c.l.b16 %v220
    %v759 = vunpack.c.h.b16 %v220
    %v760 = vunpack.c.l.b16 %v221
    %v761 = vunpack.c.h.b16 %v221
    %v762 = vunpack.c.l.b16 %v222
    %v763 = vunpack.c.h.b16 %v222
    %v764 = vunpack.c.l.b16 %v223
    %v765 = vunpack.c.h.b16 %v223
    %v766 = vunpack.c.l.b16 %v224
    %v767 = vunpack.c.h.b16 %v224
    %v768 = vunpack.c.l.b16 %v225
    %v769 = vunpack.c.h.b16 %v225
    %v770 = vunpack.c.l.b16 %v226
    %v771 = vunpack.c.h.b16 %v226
    %v772 = vunpack.c.l.b16 %v227
    %v773 = vunpack.c.h.b16 %v227
    %v774 = vunpack.c.l.b16 %v228
    %v775 = vunpack.c.h.b16 %v228
    %v776 = vunpack.c.l.b16 %v229
    %v777 = vunpack.c.h.b16 %v229
    %v778 = vunpack.c.l.b16 %v230
    %v779 = vunpack.c.h.b16 %v230
    %v780 = vunpack.c.l.b16 %v231
    %v781 = vunpack.c.h.b16 %v231
    %v782 = vunpack.c.l.b16 %v232
    %v783 = vunpack.c.h.b16 %v232
    %v784 = vunpack.c.l.b16 %v233
    %v785 = vunpack.c.h.b16 %v233
    %v786 = vunpack.c.l.b16 %v234
    %v787 = vunpack.c.h.b16 %v234
    %v788 = vunpack.c.l.b16 %v235
    %v789 = vunpack.c.h.b16 %v235
    %v790 = vunpack.c.l.b16 %v236
    %v791 = vunpack.c.h.b16 %v236
    %v792 = vunpack.c.l.b16 %v237
    %v793 = vunpack.c.h.b16 %v237
    %v794 = vunpack.c.l.b16 %v238
    %v795 = vunpack.c.h.b16 %v238
    %v796 = vunpack.c.l.b16 %v239
    %v797 = vunpack.c.h.b16 %v239
    %v798 = vunpack.c.l.b16 %v240
    %v799 = vunpack.c.h.b16 %v240
    %v800 = vunpack.c.l.b16 %v241
    %v801 = vunpack.c.h.b16 %v241
    %v802 = vunpack.c.l.b16 %v242
    %v803 = vunpack.c.h.b16 %v242
    %v804 = vunpack.c.l.b16 %v243
    %v805 = vunpack.c.h.b16 %v243
    %v806 = vunpack.c.l.b16 %v244
    %v807 = vunpack.c.h.b16 %v244
    %v808 = vunpack.c.l.b16 %v245
    %v809 = vunpack.c.h.b16 %v245
    %v810 = vunpack.c.l.b16 %v246
    %v811 = vunpack.c.h.b16 %v246
    %v812 = vunpack.c.l.b16 %v247
    %v813 = vunpack.c.h.b16 %v247
    %v814 = vunpack.c.l.b16 %v248
    %v815 = vunpack.c.h.b16 %v248
    %v816 = vunpack.c.l.b16 %v249
    %v817 = vunpack.c.h.b16 %v249
    %v818 = vunpack.c.l.b16 %v250
    %v819 = vunpack.c.h.b16 %v250
    %v820 = vunpack.c.l.b16 %v251
    %v821 = vunpack.c.h.b16 %v251
    %v822 = vunpack.c.l.b16 %v252
    %v823 = vunpack.c.h.b16 %v252
    %v824 = vunpack.c.l.b16 %v253
    %v825 = vunpack.c.h.b16 %v253
    %v826 = vunpack.c.l.b16 %v254
    %v827 = vunpack.c.h.b16 %v254
    %v828 = vunpack.c.l.b16 %v255
    %v829 = vunpack.c.h.b16 %v255
    %v830 = vunpack.c.l.b16 %v256
    %v831 = vunpack.c.h.b16 %v256
    %v832 = vunpack.c.l.b16 %v257
    %v833 = vunpack.c.h.b16 %v257
    %v834 = vunpack.c.l.b16 %v258
    %v835 = vunpack.c.h.b16 %v258
    %v836 = vunpack.c.l.b16 %v259
    %v837 = vunpack.c.h.b16 %v259
    %v838 = vunpack.c.l.b16 %v260
    %v839 = vunpack.c.h.b16 %v260
    %v840 = vunpack.c.l.b16 %v261
    %v841 = vunpack.c.h.b16 %v261
    %v842 = vunpack.c.l.b16 %v262
    %v843 = vunpack.c.h.b16 %v262
    %v844 = vunpack.c.l.b16 %v263
    %v845 = vunpack.c.h.b16 %v263
    %v846 = vunpack.c.l.b16 %v264
    %v847 = vunpack.c.h.b16 %v264
    %v848 = vunpack.c.l.b16 %v265
    %v849 = vunpack.c.h.b16 %v265
    %v850 = vunpack.c.l.b16 %v266
    %v851 = vunpack.c.h.b16 %v266
    %v852 = vunpack.c.l.b16 %v267
    %v853 = vunpack.c.h.b16 %v267
    %v854 = vunpack.c.l.b16 %v268
    %v855 = vunpack.c.h.b16 %v268
    %v856 = vunpack.c.l.b16 %v269
    %v857 = vunpack.c.h.b16 %v269
    %v858 = vunpack.c.l.b16 %v270
    %v859 = vunpack.c.h.b16 %v270
    %v860 = vunpack.c.l.b16 %v271
    %v861 = vunpack.c.h.b16 %v271
    %v862 = vunpack.c.l.b16 %v272
    %v863 = vunpack.c.h.b16 %v272
    %v864 = vunpack.c.l.b16 %v273
    %v865 = vunpack.c.h.b16 %v273
    %v866 = vunpack.c.l.b16 %v274
    %v867 = vunpack.c.h.b16 %v274
    %v868 = vunpack.c.l.b16 %v275
    %v869 = vunpack.c.h.b16 %v275
    %v870 = vunpack.c.l.b16 %v276
    %v871 = vunpack.c.h.b16 %v276
    %v872 = vunpack.c.l.b16 %v277
    %v873 = vunpack.c.h.b16 %v277
    %v874 = vunpack.c.l.b16 %v278
    %v875 = vunpack.c.h.b16 %v278
    %v876 = vunpack.c.l.b16 %v279
    %v877 = vunpack.c.h.b16 %v279
    %v878 = vunpack.c.l.b16 %v280
    %v879 = vunpack.c.h.b16 %v280
    %v880 = vunpack.c.l.b16 %v281
    %v881 = vunpack.c.h.b16 %v281
    %v882 = vunpack.c.l.b16 %v282
    %v883 = vunpack.c.h.b16 %v282
    %v884 = vunpack.c.l.b16 %v283
    %v885 = vunpack.c.h.b16 %v283
    %v886 = vunpack.c.l.b16 %v284
    %v887 = vunpack.c.h.b16 %v284
    %v888 = vunpack.c.l.b16 %v285
    %v889 = vunpack.c.h.b16 %v285
    %v890 = vunpack.c.l.b16 %v286
    %v891 = vunpack.c.h.b16 %v286
    %v892 = vunpack.c.l.b16 %v287
    %v893 = vunpack.c.h.b16 %v287
    %v894 = vunpack.c.l.b16 %v288
    %v895 = vunpack.c.h.b16 %v288
    %v896 = vunpack.c.l.b16 %v289
    %v897 = vunpack.c.h.b16 %v289
    %v898 = vunpack.c.l.b16 %v290
    %v899 = vunpack.c.h.b16 %v290
    %v900 = vunpack.c.l.b16 %v291
    %v901 = vunpack.c.h.b16 %v291
    %v902 = vpack.c.b16 %v514, %v510
    %v903 = vpack.c.b16 %v515, %v511
    %v904 = vpack.c.b16 %v516, %v512
    %v905 = vpack.c.b16 %v517, %v513
    %v906 = vpack.c.b16 %v522, %v518
    %v907 = vpack.c.b16 %v523, %v519
    %v908 = vpack.c.b16 %v524, %v520
    %v909 = vpack.c.b16 %v525, %v521
    %v910 = vpack.c.b16 %v530, %v526
    %v911 = vpack.c.b16 %v531, %v527
    %v912 = vpack.c.b16 %v532, %v528
    %v913 = vpack.c.b16 %v533, %v529
    %v914 = vpack.c.b16 %v538, %v534
    %v915 = vpack.c.b16 %v539, %v535
    %v916 = vpack.c.b16 %v540, %v536
    %v917 = vpack.c.b16 %v541, %v537
    %v918 = vpack.c.b16 %v546, %v542
    %v919 = vpack.c.b16 %v547, %v543
    %v920 = vpack.c.b16 %v548, %v544
    %v921 = vpack.c.b16 %v549, %v545
    %v922 = vpack.c.b16 %v554, %v550
    %v923 = vpack.c.b16 %v555, %v551
    %v924 = vpack.c.b16 %v556, %v552
    %v925 = vpack.c.b16 %v557, %v553
    %v926 = vpack.c.b16 %v562, %v558
    %v927 = vpack.c.b16 %v563, %v559
    %v928 = vpack.c.b16 %v564, %v560
    %v929 = vpack.c.b16 %v565, %v561
    %v930 = vpack.c.b16 %v570, %v566
    %v931 = vpack.c.b16 %v571, %v567
    %v932 = vpack.c.b16 %v572, %v568
    %v933 = vpack.c.b16 %v573, %v569
    %v934 = vpack.c.b16 %v578, %v574
    %v935 = vpack.c.b16 %v579, %v575
    %v936 = vpack.c.b16 %v580, %v576
    %v937 = vpack.c.b16 %v581, %v577
    %v938 = vpack.c.b16 %v586, %v582
    %v939 = vpack.c.b16 %v587, %v583
    %v940 = vpack.c.b16 %v588, %v584
    %v941 = vpack.c.b16 %v589, %v585
    %v942 = vpack.c.b16 %v594, %v590
    %v943 = vpack.c.b16 %v595, %v591
    %v944 = vpack.c.b16 %v596, %v592
    %v945 = vpack.c.b16 %v597, %v593
    %v946 = vpack.c.b16 %v602, %v598
    %v947 = vpack.c.b16 %v603, %v599
    %v948 = vpack.c.b16 %v604, %v600
    %v949 = vpack.c.b16 %v605, %v601
    %v950 = vpack.c.b16 %v610, %v606
    %v951 = vpack.c.b16 %v611, %v607
    %v952 = vpack.c.b16 %v612, %v608
    %v953 = vpack.c.b16 %v613, %v609
    %v954 = vpack.c.b16 %v618, %v614
    %v955 = vpack.c.b16 %v619, %v615
    %v956 = vpack.c.b16 %v620, %v616
    %v957 = vpack.c.b16 %v621, %v617
    %v958 = vpack.c.b16 %v626, %v622
    %v959 = vpack.c.b16 %v627, %v623
    %v960 = vpack.c.b16 %v628, %v624
    %v961 = vpack.c.b16 %v629, %v625
    %v962 = vpack.c.b16 %v634, %v630
    %v963 = vpack.c.b16 %v635, %v631
    %v964 = vpack.c.b16 %v636, %v632
    %v965 = vpack.c.b16 %v637, %v633
    %v966 = vpack.c.b16 %v642, %v638
    %v967 = vpack.c.b16 %v643, %v639
    %v968 = vpack.c.b16 %v644, %v640
    %v969 = vpack.c.b16 %v645, %v641
    %v970 = vpack.c.b16 %v650, %v646
    %v971 = vpack.c.b16 %v651, %v647
    %v972 = vpack.c.b16 %v652, %v648
    %v973 = vpack.c.b16 %v653, %v649
    %v974 = vpack.c.b16 %v658, %v654
    %v975 = vpack.c.b16 %v659, %v655
    %v976 = vpack.c.b16 %v660, %v656
    %v977 = vpack.c.b16 %v661, %v657
    %v978 = vpack.c.b16 %v666, %v662
    %v979 = vpack.c.b16 %v667, %v663
    %v980 = vpack.c.b16 %v668, %v664
    %v981 = vpack.c.b16 %v669, %v665
    %v982 = vpack.c.b16 %v674, %v670
    %v983 = vpack.c.b16 %v675, %v671
    %v984 = vpack.c.b16 %v676, %v672
    %v985 = vpack.c.b16 %v677, %v673
    %v986 = vpack.c.b16 %v682, %v678
    %v987 = vpack.c.b16 %v683, %v679
    %v988 = vpack.c.b16 %v684, %v680
    %v989 = vpack.c.b16 %v685, %v681
    %v990 = vpack.c.b16 %v690, %v686
    %v991 = vpack.c.b16 %v691, %v687
    %v992 = vpack.c.b16 %v692, %v688
    %v993 = vpack.c.b16 %v693, %v689
    %v994 = vpack.c.b16 %v698, %v694
    %v995 = vpack.c.b16 %v699, %v695
    %v996 = vpack.c.b16 %v700, %v696
    %v997 = vpack.c.b16 %v701, %v697
    %v998 = vpack.c.b16 %v706, %v702
    %v999 = vpack.c.b16 %v707, %v703
    %v1000 = vpack.c.b16 %v708, %v704
    %v1001 = vpack.c.b16 %v709, %v705
    %v1002 = vpack.c.b16 %v714, %v710
    %v1003 = vpack.c.b16 %v715, %v711
    %v1004 = vpack.c.b16 %v716, %v712
    %v1005 = vpack.c.b16 %v717, %v713
    %v1006 = vpack.c.b16 %v722, %v718
    %v1007 = vpack.c.b16 %v723, %v719
    %v1008 = vpack.c.b16 %v724, %v720
    %v1009 = vpack.c.b16 %v725, %v721
    %v1010 = vpack.c.b16 %v730, %v726
    %v1011 = vpack.c.b16 %v731, %v727
    %v1012 = vpack.c.b16 %v732, %v728
    %v1013 = vpack.c.b16 %v733, %v729
    %v1014 = vpack.c.b16 %v738, %v734
    %v1015 = vpack.c.b16 %v739, %v735
    %v1016 = vpack.c.b16 %v740, %v736
    %v1017 = vpack.c.b16 %v741, %v737
    %v1018 = vpack.c.b16 %v746, %v742
    %v1019 = vpack.c.b16 %v747, %v743
    %v1020 = vpack.c.b16 %v748, %v744
    %v1021 = vpack.c.b16 %v749, %v745
    %v1022 = vpack.c.b16 %v754, %v750
    %v1023 = vpack.c.b16 %v755, %v751
    %v1024 = vpack.c.b16 %v756, %v752
    %v1025 = vpack.c.b16 %v757, %v753
    %v1026 = vpack.c.b16 %v762, %v758
    %v1027 = vpack.c.b16 %v763, %v759
    %v1028 = vpack.c.b16 %v764, %v760
    %v1029 = vpack.c.b16 %v765, %v761
    %v1030 = vpack.c.b16 %v770, %v766
    %v1031 = vpack.c.b16 %v771, %v767
    %v1032 = vpack.c.b16 %v772, %v768
    %v1033 = vpack.c.b16 %v773, %v769
    %v1034 = vpack.c.b16 %v778, %v774
    %v1035 = vpack.c.b16 %v779, %v775
    %v1036 = vpack.c.b16 %v780, %v776
    %v1037 = vpack.c.b16 %v781, %v777
    %v1038 = vpack.c.b16 %v786, %v782
    %v1039 = vpack.c.b16 %v787, %v783
    %v1040 = vpack.c.b16 %v788, %v784
    %v1041 = vpack.c.b16 %v789, %v785
    %v1042 = vpack.c.b16 %v794, %v790
    %v1043 = vpack.c.b16 %v795, %v791
    %v1044 = vpack.c.b16 %v796, %v792
    %v1045 = vpack.c.b16 %v797, %v793
    %v1046 = vpack.c.b16 %v802, %v798
    %v1047 = vpack.c.b16 %v803, %v799
    %v1048 = vpack.c.b16 %v804, %v800
    %v1049 = vpack.c.b16 %v805, %v801
    %v1050 = vpack.c.b16 %v810, %v806
    %v1051 = vpack.c.b16 %v811, %v807
    %v1052 = vpack.c.b16 %v812, %v808
    %v1053 = vpack.c.b16 %v813, %v809
    %v1054 = vpack.c.b16 %v818, %v814
    %v1055 = vpack.c.b16 %v819, %v815
    %v1056 = vpack.c.b16 %v820, %v816
    %v1057 = vpack.c.b16 %v821, %v817
    %v1058 = vpack.c.b16 %v826, %v822
    %v1059 = vpack.c.b16 %v827, %v823
    %v1060 = vpack.c.b16 %v828, %v824
    %v1061 = vpack.c.b16 %v829, %v825
    %v1062 = vpack.c.b16 %v834, %v830
    %v1063 = vpack.c.b16 %v835, %v831
    %v1064 = vpack.c.b16 %v836, %v832
    %v1065 = vpack.c.b16 %v837, %v833
    %v1066 = vpack.c.b16 %v842, %v838
    %v1067 = vpack.c.b16 %v843, %v839
    %v1068 = vpack.c.b16 %v844, %v840
    %v1069 = vpack.c.b16 %v845, %v841
    %v1070 = vpack.c.b16 %v850, %v846
    %v1071 = vpack.c.b16 %v851, %v847
    %v1072 = vpack.c.b16 %v852, %v848
    %v1073 = vpack.c.b16 %v853, %v849
    %v1074 = vpack.c.b16 %v858, %v854
    %v1075 = vpack.c.b16 %v859, %v855
    %v1076 = vpack.c.b16 %v860, %v856
    %v1077 = vpack.c.b16 %v861, %v857
    %v1078 = vpack.c.b16 %v866, %v862
    %v1079 = vpack.c.b16 %v867, %v863
    %v1080 = vpack.c.b16 %v868, %v864
    %v1081 = vpack.c.b16 %v869, %v865
    %v1082 = vpack.c.b16 %v874, %v870
    %v1083 = vpack.c.b16 %v875, %v871
    %v1084 = vpack.c.b16 %v876, %v872
    %v1085 = vpack.c.b16 %v877, %v873
    %v1086 = vpack.c.b16 %v882, %v878
    %v1087 = vpack.c.b16 %v883, %v879
    %v1088 = vpack.c.b16 %v884, %v880
    %v1089 = vpack.c.b16 %v885, %v881
    %v1090 = vpack.c.b16 %v890, %v886
    %v1091 = vpack.c.b16 %v891, %v887
    %v1092 = vpack.c.b16 %v892, %v888
    %v1093 = vpack.c.b16 %v893, %v889
    %v1094 = vpack.c.b16 %v898, %v894
    %v1095 = vpack.c.b16 %v899, %v895
    %v1096 = vpack.c.b16 %v900, %v896
    %v1097 = vpack.c.b16 %v901, %v897
    %vm1294 = vcmask 130048
    %v1296 = vsel %vm1294, %v95, 0
    %1298 = vmatprep.subr.bf16.mxu0 %v903
    %1299 = vmatpush1.bf16.msra.mxu0 %v902
    %1300 = vmatprep.subr.bf16.mxu0 %v907
    %1301 = vmatpush1.bf16.msra.mxu0 %v906
    %1302 = vmatprep.subr.bf16.mxu0 %v911
    %1303 = vmatpush1.bf16.msra.mxu0 %v910
    %1304 = vmatprep.subr.bf16.mxu0 %v915
    %1305 = vmatpush1.bf16.msra.mxu0 %v914
    %1306 = vmatprep.subr.bf16.mxu0 %v919
    %1307 = vmatpush1.bf16.msra.mxu0 %v918
    %1308 = vmatprep.subr.bf16.mxu0 %v923
    %1309 = vmatpush1.bf16.msra.mxu0 %v922
    %1310 = vmatprep.subr.bf16.mxu0 %v927
    %1311 = vmatpush1.bf16.msra.mxu0 %v926
    %1312 = vmatprep.subr.bf16.mxu0 %v931
    %1313 = vmatpush1.bf16.msra.mxu0 %v930
    %1314 = vmatprep.subr.bf16.mxu0 %v935
    %1315 = vmatpush1.bf16.msra.mxu0 %v934
    %1316 = vmatprep.subr.bf16.mxu0 %v939
    %1317 = vmatpush1.bf16.msra.mxu0 %v938
    %1318 = vmatprep.subr.bf16.mxu0 %v943
    %1319 = vmatpush1.bf16.msra.mxu0 %v942
    %1320 = vmatprep.subr.bf16.mxu0 %v947
    %1321 = vmatpush1.bf16.msra.mxu0 %v946
    %1322 = vmatprep.subr.bf16.mxu0 %v951
    %1323 = vmatpush1.bf16.msra.mxu0 %v950
    %1324 = vmatprep.subr.bf16.mxu0 %v955
    %1325 = vmatpush1.bf16.msra.mxu0 %v954
    %1326 = vmatprep.subr.bf16.mxu0 %v959
    %1327 = vmatpush1.bf16.msra.mxu0 %v958
    %1328 = vmatprep.subr.bf16.mxu0 %v963
    %1329 = vmatpush1.bf16.msra.mxu0 %v962
    %1330 = vmatprep.mubr.bf16.mxu0 %v90
    %1331 = vmatmul.mubr.bf16.gmra.mrb[0].mxu0 %v89
    %v1332 = vpop.f32.mrb[0].mxu0
    %v1333 = vadd.f32 %v297, %v1332
    %v1334 = vpop.f32.mrb[0].mxu0
    %v1335 = vadd.f32 %v301, %v1334
    %v1336 = vpop.f32.mrb[0].mxu0
    %v1337 = vpop.f32.mrb[0].mxu0
    %1338 = vdwg.mxu0
    %1339 = vmatprep.subr.bf16.mxu0 %v967
    %1340 = vmatpush1.bf16.msra.mxu0 %v966
    %1341 = vmatprep.subr.bf16.mxu0 %v971
    %1342 = vmatpush1.bf16.msra.mxu0 %v970
    %1343 = vmatprep.subr.bf16.mxu0 %v975
    %1344 = vmatpush1.bf16.msra.mxu0 %v974
    %1345 = vmatprep.subr.bf16.mxu0 %v979
    %1346 = vmatpush1.bf16.msra.mxu0 %v978
    %1347 = vmatprep.subr.bf16.mxu0 %v983
    %1348 = vmatpush1.bf16.msra.mxu0 %v982
    %1349 = vmatprep.subr.bf16.mxu0 %v987
    %1350 = vmatpush1.bf16.msra.mxu0 %v986
    %1351 = vmatprep.subr.bf16.mxu0 %v991
    %1352 = vmatpush1.bf16.msra.mxu0 %v990
    %1353 = vmatprep.subr.bf16.mxu0 %v995
    %1354 = vmatpush1.bf16.msra.mxu0 %v994
    %1355 = vmatprep.subr.bf16.mxu0 %v999
    %1356 = vmatpush1.bf16.msra.mxu0 %v998
    %1357 = vmatprep.subr.bf16.mxu0 %v1003
    %1358 = vmatpush1.bf16.msra.mxu0 %v1002
    %1359 = vmatprep.subr.bf16.mxu0 %v1007
    %1360 = vmatpush1.bf16.msra.mxu0 %v1006
    %1361 = vmatprep.subr.bf16.mxu0 %v1011
    %1362 = vmatpush1.bf16.msra.mxu0 %v1010
    %1363 = vmatprep.subr.bf16.mxu0 %v1015
    %1364 = vmatpush1.bf16.msra.mxu0 %v1014
    %1365 = vmatprep.subr.bf16.mxu0 %v1019
    %1366 = vmatpush1.bf16.msra.mxu0 %v1018
    %1367 = vmatprep.subr.bf16.mxu0 %v1023
    %1368 = vmatpush1.bf16.msra.mxu0 %v1022
    %1369 = vmatprep.subr.bf16.mxu0 %v1027
    %1370 = vmatpush1.bf16.msra.mxu0 %v1026
    %1371 = vmatprep.mubr.bf16.mxu0 %v92
    %1372 = vmatmul.mubr.bf16.gmra.mrb[0].mxu0 %v91
    %v1373 = vpop.f32.mrb[0].mxu0
    %v1374 = vadd.f32 %v1333, %v1373
    %v1375 = vpop.f32.mrb[0].mxu0
    %v1376 = vadd.f32 %v1335, %v1375
    %v1377 = vpop.f32.mrb[0].mxu0
    %v1378 = vpop.f32.mrb[0].mxu0
    %1379 = vdwg.mxu0
    %1380 = vmatprep.subr.bf16.mxu0 %v1031
    %1381 = vmatpush1.bf16.msra.mxu0 %v1030
    %1382 = vmatprep.subr.bf16.mxu0 %v1035
    %1383 = vmatpush1.bf16.msra.mxu0 %v1034
    %1384 = vmatprep.subr.bf16.mxu0 %v1039
    %1385 = vmatpush1.bf16.msra.mxu0 %v1038
    %1386 = vmatprep.subr.bf16.mxu0 %v1043
    %1387 = vmatpush1.bf16.msra.mxu0 %v1042
    %1388 = vmatprep.subr.bf16.mxu0 %v1047
    %1389 = vmatpush1.bf16.msra.mxu0 %v1046
    %1390 = vmatprep.subr.bf16.mxu0 %v1051
    %1391 = vmatpush1.bf16.msra.mxu0 %v1050
    %1392 = vmatprep.subr.bf16.mxu0 %v1055
    %1393 = vmatpush1.bf16.msra.mxu0 %v1054
    %1394 = vmatprep.subr.bf16.mxu0 %v1059
    %1395 = vmatpush1.bf16.msra.mxu0 %v1058
    %1396 = vmatprep.subr.bf16.mxu0 %v1063
    %1397 = vmatpush1.bf16.msra.mxu0 %v1062
    %1398 = vmatprep.subr.bf16.mxu0 %v1067
    %1399 = vmatpush1.bf16.msra.mxu0 %v1066
    %1400 = vmatprep.subr.bf16.mxu0 %v1071
    %1401 = vmatpush1.bf16.msra.mxu0 %v1070
    %1402 = vmatprep.subr.bf16.mxu0 %v1075
    %1403 = vmatpush1.bf16.msra.mxu0 %v1074
    %1404 = vmatprep.subr.bf16.mxu0 %v1079
    %1405 = vmatpush1.bf16.msra.mxu0 %v1078
    %1406 = vmatprep.subr.bf16.mxu0 %v1083
    %1407 = vmatpush1.bf16.msra.mxu0 %v1082
    %1408 = vmatprep.subr.bf16.mxu0 %v1087
    %1409 = vmatpush1.bf16.msra.mxu0 %v1086
    %1410 = vmatprep.subr.bf16.mxu0 %v1091
    %1411 = vmatpush1.bf16.msra.mxu0 %v1090
    %1412 = vmatprep.mubr.bf16.mxu0 %v94
    %1413 = vmatmul.mubr.bf16.gmra.mrb[0].mxu0 %v93
    %v1414 = vpop.f32.mrb[0].mxu0
    %v1415 = vadd.f32 %v1374, %v1414
    %v1416 = vpop.f32.mrb[0].mxu0
    %v1417 = vadd.f32 %v1376, %v1416
    %v1418 = vpop.f32.mrb[0].mxu0
    %v1419 = vpop.f32.mrb[0].mxu0
    %1420 = vdwg.mxu0
    %1421 = vmatprep.subr.bf16.mxu0 %v1095
    %1422 = vmatpush1.bf16.msra.mxu0 %v1094
    %1423 = vmatprep.subr.bf16.mxu0 0
    %1424 = vmatpush1.bf16.msra.mxu0 0
    %1425 = vmatprep.subr.bf16.mxu0 0
    %1426 = vmatpush1.bf16.msra.mxu0 0
    %1427 = vmatprep.subr.bf16.mxu0 0
    %1428 = vmatpush1.bf16.msra.mxu0 0
    %1429 = vmatprep.subr.bf16.mxu0 0
    %1430 = vmatpush1.bf16.msra.mxu0 0
    %1431 = vmatprep.subr.bf16.mxu0 0
    %1432 = vmatpush1.bf16.msra.mxu0 0
    %1433 = vmatprep.subr.bf16.mxu0 0
    %1434 = vmatpush1.bf16.msra.mxu0 0
    %1435 = vmatprep.subr.bf16.mxu0 0
    %1436 = vmatpush1.bf16.msra.mxu0 0
    %1437 = vmatprep.subr.bf16.mxu0 0
    %1438 = vmatpush1.bf16.msra.mxu0 0
    %1439 = vmatprep.subr.bf16.mxu0 0
    %1440 = vmatpush1.bf16.msra.mxu0 0
    %1441 = vmatprep.subr.bf16.mxu0 0
    %1442 = vmatpush1.bf16.msra.mxu0 0
    %1443 = vmatprep.subr.bf16.mxu0 0
    %1444 = vmatpush1.bf16.msra.mxu0 0
    %1445 = vmatprep.subr.bf16.mxu0 0
    %1446 = vmatpush1.bf16.msra.mxu0 0
    %1447 = vmatprep.subr.bf16.mxu0 0
    %1448 = vmatpush1.bf16.msra.mxu0 0
    %1449 = vmatprep.subr.bf16.mxu0 0
    %1450 = vmatpush1.bf16.msra.mxu0 0
    %1451 = vmatprep.subr.bf16.mxu0 0
    %1452 = vmatpush1.bf16.msra.mxu0 0
    %1453 = vmatprep.mubr.bf16.mxu0 0
    %1454 = vmatmul.mubr.bf16.gmra.mrb[0].mxu0 %v1296
    %v1455 = vpop.f32.mrb[0].mxu0
    %v1456 = vadd.f32 %v1415, %v1455
    %v1457 = vpop.f32.mrb[0].mxu0
    %v1458 = vadd.f32 %v1417, %v1457
    %v1459 = vpop.f32.mrb[0].mxu0
    %v1460 = vpop.f32.mrb[0].mxu0
    %1461 = vdwg.mxu0
    %1462 = vmatprep.subr.bf16.mxu0 %v905
    %1463 = vmatpush1.bf16.msra.mxu0 %v904
    %1464 = vmatprep.subr.bf16.mxu0 %v909
    %1465 = vmatpush1.bf16.msra.mxu0 %v908
    %1466 = vmatprep.subr.bf16.mxu0 %v913
    %1467 = vmatpush1.bf16.msra.mxu0 %v912
    %1468 = vmatprep.subr.bf16.mxu0 %v917
    %1469 = vmatpush1.bf16.msra.mxu0 %v916
    %1470 = vmatprep.subr.bf16.mxu0 %v921
    %1471 = vmatpush1.bf16.msra.mxu0 %v920
    %1472 = vmatprep.subr.bf16.mxu0 %v925
    %1473 = vmatpush1.bf16.msra.mxu0 %v924
    %1474 = vmatprep.subr.bf16.mxu0 %v929
    %1475 = vmatpush1.bf16.msra.mxu0 %v928
    %1476 = vmatprep.subr.bf16.mxu0 %v933
    %1477 = vmatpush1.bf16.msra.mxu0 %v932
    %1478 = vmatprep.subr.bf16.mxu0 %v937
    %1479 = vmatpush1.bf16.msra.mxu0 %v936
    %1480 = vmatprep.subr.bf16.mxu0 %v941
    %1481 = vmatpush1.bf16.msra.mxu0 %v940
    %1482 = vmatprep.subr.bf16.mxu0 %v945
    %1483 = vmatpush1.bf16.msra.mxu0 %v944
    %1484 = vmatprep.subr.bf16.mxu0 %v949
    %1485 = vmatpush1.bf16.msra.mxu0 %v948
    %1486 = vmatprep.subr.bf16.mxu0 %v953
    %1487 = vmatpush1.bf16.msra.mxu0 %v952
    %1488 = vmatprep.subr.bf16.mxu0 %v957
    %1489 = vmatpush1.bf16.msra.mxu0 %v956
    %1490 = vmatprep.subr.bf16.mxu0 %v961
    %1491 = vmatpush1.bf16.msra.mxu0 %v960
    %1492 = vmatprep.subr.bf16.mxu0 %v965
    %1493 = vmatpush1.bf16.msra.mxu0 %v964
    %1494 = vmatprep.mubr.bf16.mxu0 %v90
    %1495 = vmatmul.mubr.bf16.gmra.mrb[0].mxu0 %v89
    %v1496 = vpop.f32.mrb[0].mxu0
    %v1497 = vadd.f32 %v305, %v1496
    %v1498 = vpop.f32.mrb[0].mxu0
    %v1499 = vadd.f32 %v309, %v1498
    %v1500 = vpop.f32.mrb[0].mxu0
    %v1501 = vpop.f32.mrb[0].mxu0
    %1502 = vdwg.mxu0
    %1503 = vmatprep.subr.bf16.mxu0 %v969
    %1504 = vmatpush1.bf16.msra.mxu0 %v968
    %1505 = vmatprep.subr.bf16.mxu0 %v973
    %1506 = vmatpush1.bf16.msra.mxu0 %v972
    %1507 = vmatprep.subr.bf16.mxu0 %v977
    %1508 = vmatpush1.bf16.msra.mxu0 %v976
    %1509 = vmatprep.subr.bf16.mxu0 %v981
    %1510 = vmatpush1.bf16.msra.mxu0 %v980
    %1511 = vmatprep.subr.bf16.mxu0 %v985
    %1512 = vmatpush1.bf16.msra.mxu0 %v984
    %1513 = vmatprep.subr.bf16.mxu0 %v989
    %1514 = vmatpush1.bf16.msra.mxu0 %v988
    %1515 = vmatprep.subr.bf16.mxu0 %v993
    %1516 = vmatpush1.bf16.msra.mxu0 %v992
    %1517 = vmatprep.subr.bf16.mxu0 %v997
    %1518 = vmatpush1.bf16.msra.mxu0 %v996
    %1519 = vmatprep.subr.bf16.mxu0 %v1001
    %1520 = vmatpush1.bf16.msra.mxu0 %v1000
    %1521 = vmatprep.subr.bf16.mxu0 %v1005
    %1522 = vmatpush1.bf16.msra.mxu0 %v1004
    %1523 = vmatprep.subr.bf16.mxu0 %v1009
    %1524 = vmatpush1.bf16.msra.mxu0 %v1008
    %1525 = vmatprep.subr.bf16.mxu0 %v1013
    %1526 = vmatpush1.bf16.msra.mxu0 %v1012
    %1527 = vmatprep.subr.bf16.mxu0 %v1017
    %1528 = vmatpush1.bf16.msra.mxu0 %v1016
    %1529 = vmatprep.subr.bf16.mxu0 %v1021
    %1530 = vmatpush1.bf16.msra.mxu0 %v1020
    %1531 = vmatprep.subr.bf16.mxu0 %v1025
    %1532 = vmatpush1.bf16.msra.mxu0 %v1024
    %1533 = vmatprep.subr.bf16.mxu0 %v1029
    %1534 = vmatpush1.bf16.msra.mxu0 %v1028
    %1535 = vmatprep.mubr.bf16.mxu0 %v92
    %1536 = vmatmul.mubr.bf16.gmra.mrb[0].mxu0 %v91
    %v1537 = vpop.f32.mrb[0].mxu0
    %v1538 = vadd.f32 %v1497, %v1537
    %v1539 = vpop.f32.mrb[0].mxu0
    %v1540 = vadd.f32 %v1499, %v1539
    %v1541 = vpop.f32.mrb[0].mxu0
    %v1542 = vpop.f32.mrb[0].mxu0
    %1543 = vdwg.mxu0
    %1544 = vmatprep.subr.bf16.mxu0 %v1033
    %1545 = vmatpush1.bf16.msra.mxu0 %v1032
    %1546 = vmatprep.subr.bf16.mxu0 %v1037
    %1547 = vmatpush1.bf16.msra.mxu0 %v1036
    %1548 = vmatprep.subr.bf16.mxu0 %v1041
    %1549 = vmatpush1.bf16.msra.mxu0 %v1040
    %1550 = vmatprep.subr.bf16.mxu0 %v1045
    %1551 = vmatpush1.bf16.msra.mxu0 %v1044
    %1552 = vmatprep.subr.bf16.mxu0 %v1049
    %1553 = vmatpush1.bf16.msra.mxu0 %v1048
    %1554 = vmatprep.subr.bf16.mxu0 %v1053
    %1555 = vmatpush1.bf16.msra.mxu0 %v1052
    %1556 = vmatprep.subr.bf16.mxu0 %v1057
    %1557 = vmatpush1.bf16.msra.mxu0 %v1056
    %1558 = vmatprep.subr.bf16.mxu0 %v1061
    %1559 = vmatpush1.bf16.msra.mxu0 %v1060
    %1560 = vmatprep.subr.bf16.mxu0 %v1065
    %1561 = vmatpush1.bf16.msra.mxu0 %v1064
    %1562 = vmatprep.subr.bf16.mxu0 %v1069
    %1563 = vmatpush1.bf16.msra.mxu0 %v1068
    %1564 = vmatprep.subr.bf16.mxu0 %v1073
    %1565 = vmatpush1.bf16.msra.mxu0 %v1072
    %1566 = vmatprep.subr.bf16.mxu0 %v1077
    %1567 = vmatpush1.bf16.msra.mxu0 %v1076
    %1568 = vmatprep.subr.bf16.mxu0 %v1081
    %1569 = vmatpush1.bf16.msra.mxu0 %v1080
    %1570 = vmatprep.subr.bf16.mxu0 %v1085
    %1571 = vmatpush1.bf16.msra.mxu0 %v1084
    %1572 = vmatprep.subr.bf16.mxu0 %v1089
    %1573 = vmatpush1.bf16.msra.mxu0 %v1088
    %1574 = vmatprep.subr.bf16.mxu0 %v1093
    %1575 = vmatpush1.bf16.msra.mxu0 %v1092
    %1576 = vmatprep.mubr.bf16.mxu0 %v94
    %1577 = vmatmul.mubr.bf16.gmra.mrb[0].mxu0 %v93
    %v1578 = vpop.f32.mrb[0].mxu0
    %v1579 = vadd.f32 %v1538, %v1578
    %v1580 = vpop.f32.mrb[0].mxu0
    %v1581 = vadd.f32 %v1540, %v1580
    %v1582 = vpop.f32.mrb[0].mxu0
    %v1583 = vpop.f32.mrb[0].mxu0
    %1584 = vdwg.mxu0
    %1585 = vmatprep.subr.bf16.mxu0 %v1097
    %1586 = vmatpush1.bf16.msra.mxu0 %v1096
    %1587 = vmatprep.subr.bf16.mxu0 0
    %1588 = vmatpush1.bf16.msra.mxu0 0
    %1589 = vmatprep.subr.bf16.mxu0 0
    %1590 = vmatpush1.bf16.msra.mxu0 0
    %1591 = vmatprep.subr.bf16.mxu0 0
    %1592 = vmatpush1.bf16.msra.mxu0 0
    %1593 = vmatprep.subr.bf16.mxu0 0
    %1594 = vmatpush1.bf16.msra.mxu0 0
    %1595 = vmatprep.subr.bf16.mxu0 0
    %1596 = vmatpush1.bf16.msra.mxu0 0
    %1597 = vmatprep.subr.bf16.mxu0 0
    %1598 = vmatpush1.bf16.msra.mxu0 0
    %1599 = vmatprep.subr.bf16.mxu0 0
    %1600 = vmatpush1.bf16.msra.mxu0 0
    %1601 = vmatprep.subr.bf16.mxu0 0
    %1602 = vmatpush1.bf16.msra.mxu0 0
    %1603 = vmatprep.subr.bf16.mxu0 0
    %1604 = vmatpush1.bf16.msra.mxu0 0
    %1605 = vmatprep.subr.bf16.mxu0 0
    %1606 = vmatpush1.bf16.msra.mxu0 0
    %1607 = vmatprep.subr.bf16.mxu0 0
    %1608 = vmatpush1.bf16.msra.mxu0 0
    %1609 = vmatprep.subr.bf16.mxu0 0
    %1610 = vmatpush1.bf16.msra.mxu0 0
    %1611 = vmatprep.subr.bf16.mxu0 0
    %1612 = vmatpush1.bf16.msra.mxu0 0
    %1613 = vmatprep.subr.bf16.mxu0 0
    %1614 = vmatpush1.bf16.msra.mxu0 0
    %1615 = vmatprep.subr.bf16.mxu0 0
    %1616 = vmatpush1.bf16.msra.mxu0 0
    %1617 = vmatprep.mubr.bf16.mxu0 0
    %1618 = vmatmul.mubr.bf16.gmra.mrb[0].mxu0 %v1296
    %v1619 = vpop.f32.mrb[0].mxu0
    %v1620 = vadd.f32 %v1579, %v1619
    %v1621 = vpop.f32.mrb[0].mxu0
    %v1622 = vadd.f32 %v1581, %v1621
    %v1623 = vpop.f32.mrb[0].mxu0
    %v1624 = vpop.f32.mrb[0].mxu0
    %1625 = vdwg.mxu0
    %v1626 = vmax.f32 %v1456, 0.0
    %v1627 = vmax.f32 %v1458, 0.0
    %v1628 = vmax.f32 %v1620, 0.0
    %v1629 = vmax.f32 %v1622, 0.0
    %v1630 = vpack.c.bf16 %v1626, %v1626
    %v1631 = vpack.c.bf16 %v1627, %v1627
    %v1632 = vpack.c.bf16 %v1628, %v1628
    %v1633 = vpack.c.bf16 %v1629, %v1629
    %v1634 = vld [vmem:[#allocation5] sm:$0xff]
    %v1635 = vld [vmem:[#allocation5 + $0x8] sm:$0xff]
    %v1636 = vld [vmem:[#allocation5 + $0x10] sm:$0xff]
    %v1637 = vld [vmem:[#allocation5 + $0x18] sm:$0xff]
    %v1638 = vld [vmem:[#allocation5 + $0x20] sm:$0xff]
    %v1639 = vld [vmem:[#allocation5 + $0x28] sm:$0xff]
    %v1640 = vld [vmem:[#allocation5 + $0x30] sm:$0xff]
    %v1641 = vld [vmem:[#allocation5 + $0x38] sm:$0xff]
    %v1642 = vld [vmem:[#allocation5 + $0x40] sm:$0xff]
    %v1643 = vld [vmem:[#allocation5 + $0x48] sm:$0xff]
    %v1644 = vld [vmem:[#allocation5 + $0x50] sm:$0xff]
    %v1645 = vld [vmem:[#allocation5 + $0x58] sm:$0xff]
    %v1646 = vld [vmem:[#allocation5 + $0x60] sm:$0xff]
    %v1647 = vld [vmem:[#allocation5 + $0x68] sm:$0xff]
    %v1648 = vld [vmem:[#allocation5 + $0x70] sm:$0xff]
    %v1649 = vld [vmem:[#allocation5 + $0x78] sm:$0xff]
    %v1650 = vld [vmem:[#allocation5 + $0x80] sm:$0xff]
    %v1651 = vld [vmem:[#allocation5 + $0x88] sm:$0xff]
    %v1652 = vld [vmem:[#allocation5 + $0x90] sm:$0xff]
    %v1653 = vld [vmem:[#allocation5 + $0x98] sm:$0xff]
    %v1654 = vld [vmem:[#allocation5 + $0xa0] sm:$0xff]
    %v1655 = vld [vmem:[#allocation5 + $0xa8] sm:$0xff]
    %v1656 = vld [vmem:[#allocation5 + $0xb0] sm:$0xff]
    %v1657 = vld [vmem:[#allocation5 + $0xb8] sm:$0xff]
    %v1658 = vld [vmem:[#allocation5 + $0xc0] sm:$0xff]
    %v1659 = vld [vmem:[#allocation5 + $0xc8] sm:$0xff]
    %v1660 = vld [vmem:[#allocation5 + $0xd0] sm:$0xff]
    %v1661 = vld [vmem:[#allocation5 + $0xd8] sm:$0xff]
    %v1662 = vld [vmem:[#allocation5 + $0xe0] sm:$0xff]
    %v1663 = vld [vmem:[#allocation5 + $0xe8] sm:$0xff]
    %v1664 = vld [vmem:[#allocation5 + $0xf0] sm:$0xff]
    %v1665 = vld [vmem:[#allocation5 + $0xf8] sm:$0xff]
    %v1666 = vld [vmem:[#allocation5 + $0x100] sm:$0xff]
    %v1667 = vld [vmem:[#allocation5 + $0x108] sm:$0xff]
    %v1668 = vld [vmem:[#allocation5 + $0x110] sm:$0xff]
    %v1669 = vld [vmem:[#allocation5 + $0x118] sm:$0xff]
    %v1670 = vld [vmem:[#allocation5 + $0x120] sm:$0xff]
    %v1671 = vld [vmem:[#allocation5 + $0x128] sm:$0xff]
    %v1672 = vld [vmem:[#allocation5 + $0x130] sm:$0xff]
    %v1673 = vld [vmem:[#allocation5 + $0x138] sm:$0xff]
    %v1674 = vld [vmem:[#allocation5 + $0x140] sm:$0xff]
    %v1675 = vld [vmem:[#allocation5 + $0x148] sm:$0xff]
    %v1676 = vld [vmem:[#allocation5 + $0x150] sm:$0xff]
    %v1677 = vld [vmem:[#allocation5 + $0x158] sm:$0xff]
    %v1678 = vld [vmem:[#allocation5 + $0x160] sm:$0xff]
    %v1679 = vld [vmem:[#allocation5 + $0x168] sm:$0xff]
    %v1680 = vld [vmem:[#allocation5 + $0x170] sm:$0xff]
    %v1681 = vld [vmem:[#allocation5 + $0x178] sm:$0xff]
    %v1682 = vld [vmem:[#allocation5 + $0x180] sm:$0xff]
    %v1683 = vld [vmem:[#allocation5 + $0x188] sm:$0xff]
    %v1684 = vld [vmem:[#allocation5 + $0x190] sm:$0xff]
    %v1685 = vld [vmem:[#allocation5 + $0x198] sm:$0xff]
    %v1686 = vld [vmem:[#allocation5 + $0x1a0] sm:$0xff]
    %v1687 = vld [vmem:[#allocation5 + $0x1a8] sm:$0xff]
    %v1688 = vld [vmem:[#allocation5 + $0x1b0] sm:$0xff]
    %v1689 = vld [vmem:[#allocation5 + $0x1b8] sm:$0xff]
    %v1690 = vld [vmem:[#allocation5 + $0x1c0] sm:$0xff]
    %v1691 = vld [vmem:[#allocation5 + $0x1c8] sm:$0xff]
    %v1692 = vld [vmem:[#allocation5 + $0x1d0] sm:$0xff]
    %v1693 = vld [vmem:[#allocation5 + $0x1d8] sm:$0xff]
    %v1694 = vld [vmem:[#allocation5 + $0x1e0] sm:$0xff]
    %v1695 = vld [vmem:[#allocation5 + $0x1e8] sm:$0xff]
    %v1696 = vld [vmem:[#allocation5 + $0x1f0] sm:$0xff]
    %v1697 = vld [vmem:[#allocation5 + $0x1f8] sm:$0xff]
    %v1698 = vld [vmem:[%s4] sm:$0x3]
    %v1700 = vlaneseq
    %v1701 = vshrl.u32 %v1700, 7
    %v1702 = vsub.s32 0, %v1701
    %v1703 = vrot.slane %v1698, %v1702
    %v1704 = vlaneseq
    %v1705 = vshrl.u32 %v1704, 7
    %v1706 = vsub.s32 1, %v1705
    %v1707 = vrot.slane %v1698, %v1706
    %v1774 = vunpack.c.l.b16 %v1634
    %v1775 = vunpack.c.h.b16 %v1634
    %v1776 = vunpack.c.l.b16 %v1635
    %v1777 = vunpack.c.h.b16 %v1635
    %v1778 = vunpack.c.l.b16 %v1636
    %v1779 = vunpack.c.h.b16 %v1636
    %v1780 = vunpack.c.l.b16 %v1637
    %v1781 = vunpack.c.h.b16 %v1637
    %v1782 = vunpack.c.l.b16 %v1638
    %v1783 = vunpack.c.h.b16 %v1638
    %v1784 = vunpack.c.l.b16 %v1639
    %v1785 = vunpack.c.h.b16 %v1639
    %v1786 = vunpack.c.l.b16 %v1640
    %v1787 = vunpack.c.h.b16 %v1640
    %v1788 = vunpack.c.l.b16 %v1641
    %v1789 = vunpack.c.h.b16 %v1641
    %v1790 = vunpack.c.l.b16 %v1642
    %v1791 = vunpack.c.h.b16 %v1642
    %v1792 = vunpack.c.l.b16 %v1643
    %v1793 = vunpack.c.h.b16 %v1643
    %v1794 = vunpack.c.l.b16 %v1644
    %v1795 = vunpack.c.h.b16 %v1644
    %v1796 = vunpack.c.l.b16 %v1645
    %v1797 = vunpack.c.h.b16 %v1645
    %v1798 = vunpack.c.l.b16 %v1646
    %v1799 = vunpack.c.h.b16 %v1646
    %v1800 = vunpack.c.l.b16 %v1647
    %v1801 = vunpack.c.h.b16 %v1647
    %v1802 = vunpack.c.l.b16 %v1648
    %v1803 = vunpack.c.h.b16 %v1648
    %v1804 = vunpack.c.l.b16 %v1649
    %v1805 = vunpack.c.h.b16 %v1649
    %v1806 = vunpack.c.l.b16 %v1650
    %v1807 = vunpack.c.h.b16 %v1650
    %v1808 = vunpack.c.l.b16 %v1651
    %v1809 = vunpack.c.h.b16 %v1651
    %v1810 = vunpack.c.l.b16 %v1652
    %v1811 = vunpack.c.h.b16 %v1652
    %v1812 = vunpack.c.l.b16 %v1653
    %v1813 = vunpack.c.h.b16 %v1653
    %v1814 = vunpack.c.l.b16 %v1654
    %v1815 = vunpack.c.h.b16 %v1654
    %v1816 = vunpack.c.l.b16 %v1655
    %v1817 = vunpack.c.h.b16 %v1655
    %v1818 = vunpack.c.l.b16 %v1656
    %v1819 = vunpack.c.h.b16 %v1656
    %v1820 = vunpack.c.l.b16 %v1657
    %v1821 = vunpack.c.h.b16 %v1657
    %v1822 = vunpack.c.l.b16 %v1658
    %v1823 = vunpack.c.h.b16 %v1658
    %v1824 = vunpack.c.l.b16 %v1659
    %v1825 = vunpack.c.h.b16 %v1659
    %v1826 = vunpack.c.l.b16 %v1660
    %v1827 = vunpack.c.h.b16 %v1660
    %v1828 = vunpack.c.l.b16 %v1661
    %v1829 = vunpack.c.h.b16 %v1661
    %v1830 = vunpack.c.l.b16 %v1662
    %v1831 = vunpack.c.h.b16 %v1662
    %v1832 = vunpack.c.l.b16 %v1663
    %v1833 = vunpack.c.h.b16 %v1663
    %v1834 = vunpack.c.l.b16 %v1664
    %v1835 = vunpack.c.h.b16 %v1664
    %v1836 = vunpack.c.l.b16 %v1665
    %v1837 = vunpack.c.h.b16 %v1665
    %v1838 = vunpack.c.l.b16 %v1666
    %v1839 = vunpack.c.h.b16 %v1666
    %v1840 = vunpack.c.l.b16 %v1667
    %v1841 = vunpack.c.h.b16 %v1667
    %v1842 = vunpack.c.l.b16 %v1668
    %v1843 = vunpack.c.h.b16 %v1668
    %v1844 = vunpack.c.l.b16 %v1669
    %v1845 = vunpack.c.h.b16 %v1669
    %v1846 = vunpack.c.l.b16 %v1670
    %v1847 = vunpack.c.h.b16 %v1670
    %v1848 = vunpack.c.l.b16 %v1671
    %v1849 = vunpack.c.h.b16 %v1671
    %v1850 = vunpack.c.l.b16 %v1672
    %v1851 = vunpack.c.h.b16 %v1672
    %v1852 = vunpack.c.l.b16 %v1673
    %v1853 = vunpack.c.h.b16 %v1673
    %v1854 = vunpack.c.l.b16 %v1674
    %v1855 = vunpack.c.h.b16 %v1674
    %v1856 = vunpack.c.l.b16 %v1675
    %v1857 = vunpack.c.h.b16 %v1675
    %v1858 = vunpack.c.l.b16 %v1676
    %v1859 = vunpack.c.h.b16 %v1676
    %v1860 = vunpack.c.l.b16 %v1677
    %v1861 = vunpack.c.h.b16 %v1677
    %v1862 = vunpack.c.l.b16 %v1678
    %v1863 = vunpack.c.h.b16 %v1678
    %v1864 = vunpack.c.l.b16 %v1679
    %v1865 = vunpack.c.h.b16 %v1679
    %v1866 = vunpack.c.l.b16 %v1680
    %v1867 = vunpack.c.h.b16 %v1680
    %v1868 = vunpack.c.l.b16 %v1681
    %v1869 = vunpack.c.h.b16 %v1681
    %v1870 = vunpack.c.l.b16 %v1682
    %v1871 = vunpack.c.h.b16 %v1682
    %v1872 = vunpack.c.l.b16 %v1683
    %v1873 = vunpack.c.h.b16 %v1683
    %v1874 = vunpack.c.l.b16 %v1684
    %v1875 = vunpack.c.h.b16 %v1684
    %v1876 = vunpack.c.l.b16 %v1685
    %v1877 = vunpack.c.h.b16 %v1685
    %v1878 = vunpack.c.l.b16 %v1686
    %v1879 = vunpack.c.h.b16 %v1686
    %v1880 = vunpack.c.l.b16 %v1687
    %v1881 = vunpack.c.h.b16 %v1687
    %v1882 = vunpack.c.l.b16 %v1688
    %v1883 = vunpack.c.h.b16 %v1688
    %v1884 = vunpack.c.l.b16 %v1689
    %v1885 = vunpack.c.h.b16 %v1689
    %v1886 = vunpack.c.l.b16 %v1690
    %v1887 = vunpack.c.h.b16 %v1690
    %v1888 = vunpack.c.l.b16 %v1691
    %v1889 = vunpack.c.h.b16 %v1691
    %v1890 = vunpack.c.l.b16 %v1692
    %v1891 = vunpack.c.h.b16 %v1692
    %v1892 = vunpack.c.l.b16 %v1693
    %v1893 = vunpack.c.h.b16 %v1693
    %v1894 = vunpack.c.l.b16 %v1694
    %v1895 = vunpack.c.h.b16 %v1694
    %v1896 = vunpack.c.l.b16 %v1695
    %v1897 = vunpack.c.h.b16 %v1695
    %v1898 = vunpack.c.l.b16 %v1696
    %v1899 = vunpack.c.h.b16 %v1696
    %v1900 = vunpack.c.l.b16 %v1697
    %v1901 = vunpack.c.h.b16 %v1697
    %v1902 = vpack.c.b16 %v1776, %v1774
    %v1903 = vpack.c.b16 %v1777, %v1775
    %v1904 = vpack.c.b16 %v1780, %v1778
    %v1905 = vpack.c.b16 %v1781, %v1779
    %v1906 = vpack.c.b16 %v1784, %v1782
    %v1907 = vpack.c.b16 %v1785, %v1783
    %v1908 = vpack.c.b16 %v1788, %v1786
    %v1909 = vpack.c.b16 %v1789, %v1787
    %v1910 = vpack.c.b16 %v1792, %v1790
    %v1911 = vpack.c.b16 %v1793, %v1791
    %v1912 = vpack.c.b16 %v1796, %v1794
    %v1913 = vpack.c.b16 %v1797, %v1795
    %v1914 = vpack.c.b16 %v1800, %v1798
    %v1915 = vpack.c.b16 %v1801, %v1799
    %v1916 = vpack.c.b16 %v1804, %v1802
    %v1917 = vpack.c.b16 %v1805, %v1803
    %v1918 = vpack.c.b16 %v1808, %v1806
    %v1919 = vpack.c.b16 %v1809, %v1807
    %v1920 = vpack.c.b16 %v1812, %v1810
    %v1921 = vpack.c.b16 %v1813, %v1811
    %v1922 = vpack.c.b16 %v1816, %v1814
    %v1923 = vpack.c.b16 %v1817, %v1815
    %v1924 = vpack.c.b16 %v1820, %v1818
    %v1925 = vpack.c.b16 %v1821, %v1819
    %v1926 = vpack.c.b16 %v1824, %v1822
    %v1927 = vpack.c.b16 %v1825, %v1823
    %v1928 = vpack.c.b16 %v1828, %v1826
    %v1929 = vpack.c.b16 %v1829, %v1827
    %v1930 = vpack.c.b16 %v1832, %v1830
    %v1931 = vpack.c.b16 %v1833, %v1831
    %v1932 = vpack.c.b16 %v1836, %v1834
    %v1933 = vpack.c.b16 %v1837, %v1835
    %v1934 = vpack.c.b16 %v1840, %v1838
    %v1935 = vpack.c.b16 %v1841, %v1839
    %v1936 = vpack.c.b16 %v1844, %v1842
    %v1937 = vpack.c.b16 %v1845, %v1843
    %v1938 = vpack.c.b16 %v1848, %v1846
    %v1939 = vpack.c.b16 %v1849, %v1847
    %v1940 = vpack.c.b16 %v1852, %v1850
    %v1941 = vpack.c.b16 %v1853, %v1851
    %v1942 = vpack.c.b16 %v1856, %v1854
    %v1943 = vpack.c.b16 %v1857, %v1855
    %v1944 = vpack.c.b16 %v1860, %v1858
    %v1945 = vpack.c.b16 %v1861, %v1859
    %v1946 = vpack.c.b16 %v1864, %v1862
    %v1947 = vpack.c.b16 %v1865, %v1863
    %v1948 = vpack.c.b16 %v1868, %v1866
    %v1949 = vpack.c.b16 %v1869, %v1867
    %v1950 = vpack.c.b16 %v1872, %v1870
    %v1951 = vpack.c.b16 %v1873, %v1871
    %v1952 = vpack.c.b16 %v1876, %v1874
    %v1953 = vpack.c.b16 %v1877, %v1875
    %v1954 = vpack.c.b16 %v1880, %v1878
    %v1955 = vpack.c.b16 %v1881, %v1879
    %v1956 = vpack.c.b16 %v1884, %v1882
    %v1957 = vpack.c.b16 %v1885, %v1883
    %v1958 = vpack.c.b16 %v1888, %v1886
    %v1959 = vpack.c.b16 %v1889, %v1887
    %v1960 = vpack.c.b16 %v1892, %v1890
    %v1961 = vpack.c.b16 %v1893, %v1891
    %v1962 = vpack.c.b16 %v1896, %v1894
    %v1963 = vpack.c.b16 %v1897, %v1895
    %v1964 = vpack.c.b16 %v1900, %v1898
    %v1965 = vpack.c.b16 %v1901, %v1899
    %2030 = vmatprep.subr.bf16.mxu0 %v1903
    %2031 = vmatpush1.bf16.msra.mxu0 %v1902
    %2032 = vmatprep.subr.bf16.mxu0 %v1905
    %2033 = vmatpush1.bf16.msra.mxu0 %v1904
    %2034 = vmatprep.subr.bf16.mxu0 %v1907
    %2035 = vmatpush1.bf16.msra.mxu0 %v1906
    %2036 = vmatprep.subr.bf16.mxu0 %v1909
    %2037 = vmatpush1.bf16.msra.mxu0 %v1908
    %2038 = vmatprep.subr.bf16.mxu0 %v1911
    %2039 = vmatpush1.bf16.msra.mxu0 %v1910
    %2040 = vmatprep.subr.bf16.mxu0 %v1913
    %2041 = vmatpush1.bf16.msra.mxu0 %v1912
    %2042 = vmatprep.subr.bf16.mxu0 %v1915
    %2043 = vmatpush1.bf16.msra.mxu0 %v1914
    %2044 = vmatprep.subr.bf16.mxu0 %v1917
    %2045 = vmatpush1.bf16.msra.mxu0 %v1916
    %2046 = vmatprep.subr.bf16.mxu0 %v1919
    %2047 = vmatpush1.bf16.msra.mxu0 %v1918
    %2048 = vmatprep.subr.bf16.mxu0 %v1921
    %2049 = vmatpush1.bf16.msra.mxu0 %v1920
    %2050 = vmatprep.subr.bf16.mxu0 %v1923
    %2051 = vmatpush1.bf16.msra.mxu0 %v1922
    %2052 = vmatprep.subr.bf16.mxu0 %v1925
    %2053 = vmatpush1.bf16.msra.mxu0 %v1924
    %2054 = vmatprep.subr.bf16.mxu0 %v1927
    %2055 = vmatpush1.bf16.msra.mxu0 %v1926
    %2056 = vmatprep.subr.bf16.mxu0 %v1929
    %2057 = vmatpush1.bf16.msra.mxu0 %v1928
    %2058 = vmatprep.subr.bf16.mxu0 %v1931
    %2059 = vmatpush1.bf16.msra.mxu0 %v1930
    %2060 = vmatprep.subr.bf16.mxu0 %v1933
    %2061 = vmatpush1.bf16.msra.mxu0 %v1932
    %2062 = vmatprep.mubr.bf16.mxu0 %v1631
    %2063 = vmatmul.mubr.bf16.gmra.mrb[0].mxu0 %v1630
    %v2064 = vpop.f32.mrb[0].mxu0
    %v2065 = vadd.f32 %v1703, %v2064
    %v2066 = vpop.f32.mrb[0].mxu0
    %v2067 = vadd.f32 %v1707, %v2066
    %v2068 = vpop.f32.mrb[0].mxu0
    %v2069 = vpop.f32.mrb[0].mxu0
    %2070 = vdwg.mxu0
    %2071 = vmatprep.subr.bf16.mxu0 %v1935
    %2072 = vmatpush1.bf16.msra.mxu0 %v1934
    %2073 = vmatprep.subr.bf16.mxu0 %v1937
    %2074 = vmatpush1.bf16.msra.mxu0 %v1936
    %2075 = vmatprep.subr.bf16.mxu0 %v1939
    %2076 = vmatpush1.bf16.msra.mxu0 %v1938
    %2077 = vmatprep.subr.bf16.mxu0 %v1941
    %2078 = vmatpush1.bf16.msra.mxu0 %v1940
    %2079 = vmatprep.subr.bf16.mxu0 %v1943
    %2080 = vmatpush1.bf16.msra.mxu0 %v1942
    %2081 = vmatprep.subr.bf16.mxu0 %v1945
    %2082 = vmatpush1.bf16.msra.mxu0 %v1944
    %2083 = vmatprep.subr.bf16.mxu0 %v1947
    %2084 = vmatpush1.bf16.msra.mxu0 %v1946
    %2085 = vmatprep.subr.bf16.mxu0 %v1949
    %2086 = vmatpush1.bf16.msra.mxu0 %v1948
    %2087 = vmatprep.subr.bf16.mxu0 %v1951
    %2088 = vmatpush1.bf16.msra.mxu0 %v1950
    %2089 = vmatprep.subr.bf16.mxu0 %v1953
    %2090 = vmatpush1.bf16.msra.mxu0 %v1952
    %2091 = vmatprep.subr.bf16.mxu0 %v1955
    %2092 = vmatpush1.bf16.msra.mxu0 %v1954
    %2093 = vmatprep.subr.bf16.mxu0 %v1957
    %2094 = vmatpush1.bf16.msra.mxu0 %v1956
    %2095 = vmatprep.subr.bf16.mxu0 %v1959
    %2096 = vmatpush1.bf16.msra.mxu0 %v1958
    %2097 = vmatprep.subr.bf16.mxu0 %v1961
    %2098 = vmatpush1.bf16.msra.mxu0 %v1960
    %2099 = vmatprep.subr.bf16.mxu0 %v1963
    %2100 = vmatpush1.bf16.msra.mxu0 %v1962
    %2101 = vmatprep.subr.bf16.mxu0 %v1965
    %2102 = vmatpush1.bf16.msra.mxu0 %v1964
    %2103 = vmatprep.mubr.bf16.mxu0 %v1633
    %2104 = vmatmul.mubr.bf16.gmra.mrb[0].mxu0 %v1632
    %v2105 = vpop.f32.mrb[0].mxu0
    %v2106 = vadd.f32 %v2065, %v2105
    %v2107 = vpop.f32.mrb[0].mxu0
    %v2108 = vadd.f32 %v2067, %v2107
    %v2109 = vpop.f32.mrb[0].mxu0
    %v2110 = vpop.f32.mrb[0].mxu0
    %2111 = vdwg.mxu0
    %v2112 = vmax.f32 %v2106, 0.0
    %v2113 = vmax.f32 %v2108, 0.0
    %v2114 = vpack.c.bf16 %v2112, %v2112
    %v2115 = vpack.c.bf16 %v2113, %v2113
    %v2116 = vld [vmem:[#allocation7] sm:$0xf]
    %v2117 = vld [vmem:[#allocation7 + $0x4] sm:$0xf]
    %v2118 = vld [vmem:[#allocation7 + $0x8] sm:$0xf]
    %v2119 = vld [vmem:[#allocation7 + $0xc] sm:$0xf]
    %v2120 = vld [vmem:[#allocation7 + $0x10] sm:$0xf]
    %v2121 = vld [vmem:[#allocation7 + $0x14] sm:$0xf]
    %v2122 = vld [vmem:[#allocation7 + $0x18] sm:$0xf]
    %v2123 = vld [vmem:[#allocation7 + $0x1c] sm:$0xf]
    %v2124 = vld [vmem:[#allocation7 + $0x20] sm:$0xf]
    %v2125 = vld [vmem:[#allocation7 + $0x24] sm:$0xf]
    %v2126 = vld [vmem:[#allocation7 + $0x28] sm:$0xf]
    %v2127 = vld [vmem:[#allocation7 + $0x2c] sm:$0xf]
    %v2128 = vld [vmem:[#allocation7 + $0x30] sm:$0xf]
    %v2129 = vld [vmem:[#allocation7 + $0x34] sm:$0xf]
    %v2130 = vld [vmem:[#allocation7 + $0x38] sm:$0xf]
    %v2131 = vld [vmem:[#allocation7 + $0x3c] sm:$0xf]
    %v2132 = vld [vmem:[#allocation7 + $0x40] sm:$0xf]
    %v2133 = vld [vmem:[#allocation7 + $0x44] sm:$0xf]
    %v2134 = vld [vmem:[#allocation7 + $0x48] sm:$0xf]
    %v2135 = vld [vmem:[#allocation7 + $0x4c] sm:$0xf]
    %v2136 = vld [vmem:[#allocation7 + $0x50] sm:$0xf]
    %v2137 = vld [vmem:[#allocation7 + $0x54] sm:$0xf]
    %v2138 = vld [vmem:[#allocation7 + $0x58] sm:$0xf]
    %v2139 = vld [vmem:[#allocation7 + $0x5c] sm:$0xf]
    %v2140 = vld [vmem:[#allocation7 + $0x60] sm:$0xf]
    %v2141 = vld [vmem:[#allocation7 + $0x64] sm:$0xf]
    %v2142 = vld [vmem:[#allocation7 + $0x68] sm:$0xf]
    %v2143 = vld [vmem:[#allocation7 + $0x6c] sm:$0xf]
    %v2144 = vld [vmem:[#allocation7 + $0x70] sm:$0xf]
    %v2145 = vld [vmem:[#allocation7 + $0x74] sm:$0xf]
    %v2146 = vld [vmem:[#allocation7 + $0x78] sm:$0xf]
    %v2147 = vld [vmem:[#allocation7 + $0x7c] sm:$0xf]
    %v2148 = vld [vmem:[%s6] sm:$0x1]
    %v2150 = vlaneseq
    %v2151 = vshrl.u32 %v2150, 7
    %v2152 = vsub.s32 0, %v2151
    %v2153 = vrot.slane %v2148, %v2152
    %v2187 = vunpack.c.l.b16 %v2116
    %v2188 = vunpack.c.l.b16 %v2117
    %v2189 = vunpack.c.l.b16 %v2118
    %v2190 = vunpack.c.l.b16 %v2119
    %v2191 = vunpack.c.l.b16 %v2120
    %v2192 = vunpack.c.l.b16 %v2121
    %v2193 = vunpack.c.l.b16 %v2122
    %v2194 = vunpack.c.l.b16 %v2123
    %v2195 = vunpack.c.l.b16 %v2124
    %v2196 = vunpack.c.l.b16 %v2125
    %v2197 = vunpack.c.l.b16 %v2126
    %v2198 = vunpack.c.l.b16 %v2127
    %v2199 = vunpack.c.l.b16 %v2128
    %v2200 = vunpack.c.l.b16 %v2129
    %v2201 = vunpack.c.l.b16 %v2130
    %v2202 = vunpack.c.l.b16 %v2131
    %v2203 = vunpack.c.l.b16 %v2132
    %v2204 = vunpack.c.l.b16 %v2133
    %v2205 = vunpack.c.l.b16 %v2134
    %v2206 = vunpack.c.l.b16 %v2135
    %v2207 = vunpack.c.l.b16 %v2136
    %v2208 = vunpack.c.l.b16 %v2137
    %v2209 = vunpack.c.l.b16 %v2138
    %v2210 = vunpack.c.l.b16 %v2139
    %v2211 = vunpack.c.l.b16 %v2140
    %v2212 = vunpack.c.l.b16 %v2141
    %v2213 = vunpack.c.l.b16 %v2142
    %v2214 = vunpack.c.l.b16 %v2143
    %v2215 = vunpack.c.l.b16 %v2144
    %v2216 = vunpack.c.l.b16 %v2145
    %v2217 = vunpack.c.l.b16 %v2146
    %v2218 = vunpack.c.l.b16 %v2147
    %v2219 = vpack.c.b16 %v2188, %v2187
    %v2220 = vpack.c.b16 %v2190, %v2189
    %v2221 = vpack.c.b16 %v2192, %v2191
    %v2222 = vpack.c.b16 %v2194, %v2193
    %v2223 = vpack.c.b16 %v2196, %v2195
    %v2224 = vpack.c.b16 %v2198, %v2197
    %v2225 = vpack.c.b16 %v2200, %v2199
    %v2226 = vpack.c.b16 %v2202, %v2201
    %v2227 = vpack.c.b16 %v2204, %v2203
    %v2228 = vpack.c.b16 %v2206, %v2205
    %v2229 = vpack.c.b16 %v2208, %v2207
    %v2230 = vpack.c.b16 %v2210, %v2209
    %v2231 = vpack.c.b16 %v2212, %v2211
    %v2232 = vpack.c.b16 %v2214, %v2213
    %v2233 = vpack.c.b16 %v2216, %v2215
    %v2234 = vpack.c.b16 %v2218, %v2217
    %2251 = vmatprep.subr.bf16.mxu0 0
    %2252 = vmatpush1.bf16.msra.mxu0 %v2219
    %2253 = vmatprep.subr.bf16.mxu0 0
    %2254 = vmatpush1.bf16.msra.mxu0 %v2220
    %2255 = vmatprep.subr.bf16.mxu0 0
    %2256 = vmatpush1.bf16.msra.mxu0 %v2221
    %2257 = vmatprep.subr.bf16.mxu0 0
    %2258 = vmatpush1.bf16.msra.mxu0 %v2222
    %2259 = vmatprep.subr.bf16.mxu0 0
    %2260 = vmatpush1.bf16.msra.mxu0 %v2223
    %2261 = vmatprep.subr.bf16.mxu0 0
    %2262 = vmatpush1.bf16.msra.mxu0 %v2224
    %2263 = vmatprep.subr.bf16.mxu0 0
    %2264 = vmatpush1.bf16.msra.mxu0 %v2225
    %2265 = vmatprep.subr.bf16.mxu0 0
    %2266 = vmatpush1.bf16.msra.mxu0 %v2226
    %2267 = vmatprep.subr.bf16.mxu0 0
    %2268 = vmatpush1.bf16.msra.mxu0 %v2227
    %2269 = vmatprep.subr.bf16.mxu0 0
    %2270 = vmatpush1.bf16.msra.mxu0 %v2228
    %2271 = vmatprep.subr.bf16.mxu0 0
    %2272 = vmatpush1.bf16.msra.mxu0 %v2229
    %2273 = vmatprep.subr.bf16.mxu0 0
    %2274 = vmatpush1.bf16.msra.mxu0 %v2230
    %2275 = vmatprep.subr.bf16.mxu0 0
    %2276 = vmatpush1.bf16.msra.mxu0 %v2231
    %2277 = vmatprep.subr.bf16.mxu0 0
    %2278 = vmatpush1.bf16.msra.mxu0 %v2232
    %2279 = vmatprep.subr.bf16.mxu0 0
    %2280 = vmatpush1.bf16.msra.mxu0 %v2233
    %2281 = vmatprep.subr.bf16.mxu0 0
    %2282 = vmatpush1.bf16.msra.mxu0 %v2234
    %2283 = vmatprep.mubr.bf16.mxu0 %v2115
    %2284 = vmatmul.mubr.bf16.gmra.mrb[0].mxu0 %v2114
    %v2285 = vpop.f32.mrb[0].mxu0
    %v2286 = vadd.f32 %v2153, %v2285
    %v2287 = vpop.f32.mrb[0].mxu0
    %v2288 = vpop.f32.mrb[0].mxu0
    %v2289 = vpop.f32.mrb[0].mxu0
    %2290 = vdwg.mxu0
    %v2291 = vmax.f32 %v2286, 0.0
    %v2292 = vpack.c.bf16 %v2291, %v2291
    %v2293 = vld [vmem:[%s7] sm:$0xf]
    %v2294 = vld [vmem:[%s7 + $0x4] sm:$0xf]
    %v2295 = vld [vmem:[%s7 + $0x8] sm:$0xf]
    %v2296 = vld [vmem:[%s7 + $0xc] sm:$0xf]
    %v2297 = vld [vmem:[%s7 + $0x10] sm:$0xf]
    %v2298 = vld [vmem:[%s7 + $0x14] sm:$0xf]
    %v2299 = vld [vmem:[%s7 + $0x18] sm:$0xf]
    %v2300 = vld [vmem:[%s7 + $0x1c] sm:$0xf]
    %v2301 = vld [vmem:[%s7 + $0x20] sm:$0xf]
    %v2302 = vld [vmem:[%s7 + $0x24] sm:$0xf]
    %v2303 = vld [vmem:[%s7 + $0x28] sm:$0xf]
    %v2304 = vld [vmem:[%s7 + $0x2c] sm:$0xf]
    %v2305 = vld [vmem:[%s7 + $0x30] sm:$0xf]
    %v2306 = vld [vmem:[%s7 + $0x34] sm:$0xf]
    %v2307 = vld [vmem:[%s7 + $0x38] sm:$0xf]
    %v2308 = vld [vmem:[%s7 + $0x3c] sm:$0xf]
    %v2309 = vld [vmem:[%s8] sm:$0x1]
    %v2311 = vlaneseq
    %v2312 = vshrl.u32 %v2311, 7
    %v2313 = vsub.s32 0, %v2312
    %v2314 = vrot.slane %v2309, %v2313
    %v2332 = vunpack.c.l.b16 %v2293
    %v2333 = vunpack.c.l.b16 %v2294
    %v2334 = vunpack.c.l.b16 %v2295
    %v2335 = vunpack.c.l.b16 %v2296
    %v2336 = vunpack.c.l.b16 %v2297
    %v2337 = vunpack.c.l.b16 %v2298
    %v2338 = vunpack.c.l.b16 %v2299
    %v2339 = vunpack.c.l.b16 %v2300
    %v2340 = vunpack.c.l.b16 %v2301
    %v2341 = vunpack.c.l.b16 %v2302
    %v2342 = vunpack.c.l.b16 %v2303
    %v2343 = vunpack.c.l.b16 %v2304
    %v2344 = vunpack.c.l.b16 %v2305
    %v2345 = vunpack.c.l.b16 %v2306
    %v2346 = vunpack.c.l.b16 %v2307
    %v2347 = vunpack.c.l.b16 %v2308
    %v2348 = vpack.c.b16 %v2333, %v2332
    %v2349 = vpack.c.b16 %v2335, %v2334
    %v2350 = vpack.c.b16 %v2337, %v2336
    %v2351 = vpack.c.b16 %v2339, %v2338
    %v2352 = vpack.c.b16 %v2341, %v2340
    %v2353 = vpack.c.b16 %v2343, %v2342
    %v2354 = vpack.c.b16 %v2345, %v2344
    %v2355 = vpack.c.b16 %v2347, %v2346
    %2364 = vmatprep.subr.bf16.mxu0 0
    %2365 = vmatpush1.bf16.msra.mxu0 %v2348
    %2366 = vmatprep.subr.bf16.mxu0 0
    %2367 = vmatpush1.bf16.msra.mxu0 %v2349
    %2368 = vmatprep.subr.bf16.mxu0 0
    %2369 = vmatpush1.bf16.msra.mxu0 %v2350
    %2370 = vmatprep.subr.bf16.mxu0 0
    %2371 = vmatpush1.bf16.msra.mxu0 %v2351
    %2372 = vmatprep.subr.bf16.mxu0 0
    %2373 = vmatpush1.bf16.msra.mxu0 %v2352
    %2374 = vmatprep.subr.bf16.mxu0 0
    %2375 = vmatpush1.bf16.msra.mxu0 %v2353
    %2376 = vmatprep.subr.bf16.mxu0 0
    %2377 = vmatpush1.bf16.msra.mxu0 %v2354
    %2378 = vmatprep.subr.bf16.mxu0 0
    %2379 = vmatpush1.bf16.msra.mxu0 %v2355
    %2380 = vmatprep.subr.bf16.mxu0 0
    %2381 = vmatpush1.bf16.msra.mxu0 0
    %2382 = vmatprep.subr.bf16.mxu0 0
    %2383 = vmatpush1.bf16.msra.mxu0 0
    %2384 = vmatprep.subr.bf16.mxu0 0
    %2385 = vmatpush1.bf16.msra.mxu0 0
    %2386 = vmatprep.subr.bf16.mxu0 0
    %2387 = vmatpush1.bf16.msra.mxu0 0
    %2388 = vmatprep.subr.bf16.mxu0 0
    %2389 = vmatpush1.bf16.msra.mxu0 0
    %2390 = vmatprep.subr.bf16.mxu0 0
    %2391 = vmatpush1.bf16.msra.mxu0 0
    %2392 = vmatprep.subr.bf16.mxu0 0
    %2393 = vmatpush1.bf16.msra.mxu0 0
    %2394 = vmatprep.subr.bf16.mxu0 0
    %2395 = vmatpush1.bf16.msra.mxu0 0
    %2396 = vmatprep.mubr.bf16.mxu0 0
    %2397 = vmatmul.mubr.bf16.gmra.mrb[0].mxu0 %v2292
    %v2398 = vpop.f32.mrb[0].mxu0
    %v2399 = vadd.f32 %v2314, %v2398
    %v2400 = vpop.f32.mrb[0].mxu0
    %v2401 = vpop.f32.mrb[0].mxu0
    %v2402 = vpop.f32.mrb[0].mxu0
    %2403 = vdwg.mxu0
    %v2404 = vmax.f32 %v2399, 0.0
    %v2405 = vld [vmem:[%s9] sm:$0x1]
    %v2407 = vlaneseq
    %v2408 = vshrl.u32 %v2407, 7
    %v2409 = vsub.s32 0, %v2408
    %v2410 = vrot.slane %v2405, %v2409
    %v2412 = vmul.f32 %v2404, %v2410
    %vm2413 = vcmask 523264
    %v2414 = vsel %vm2413, %v2412, 0.0
    %2415 = vadd.xlane.f32.xlu0 %v2414
    %v2416 = vpop.xlane.xlu0 %2415
    %v2417 = vld [vmem:[#allocation2] sm:$0x1]
    %v2419 = vlaneseq
    %v2420 = vshrl.u32 %v2419, 7
    %v2421 = vsub.s32 0, %v2420
    %v2422 = vrot.slane %v2417, %v2421
    %v2424 = vadd.f32 %v2416, %v2422
    %v2425 = vxor.u32 %v2424, 2147483648
    %v2426 = vmul.f32 %v2425, 1.442695
    %v2427 = vpow.pop %v2426
    %v2428 = vadd.f32 %v2427, 1.0
    %v2429 = vrcp.pop %v2428
    %v2430 = vmul.f32 1.0, %v2429
    %vm2431 = vcmask 7168
    %2432 = vst.msk [vmem:[%s11] sm:$0xff] %vm2431, %v2430
    // Predicated region
    $region58: #{tpu_custom_call.1} parent=1 // pred_check
      _
    $region59: #{tpu_custom_call.1} parent=1 // pred_check_branch
      %2434 = sbr.rel (0) target = $region61
    $region60: #{tpu_custom_call.1} parent=1 // pred_region
      _
    $region61: #{tpu_custom_call.1} parent=1 // pred_fallthru
      _
    // Predicated region
    $region62: #{tpu_custom_call.1} parent=1 // pred_check
      _
    $region63: #{tpu_custom_call.1} parent=1 // pred_check_branch
      %2436 = sbr.rel (0) target = $region65
    $region64: #{tpu_custom_call.1} parent=1 // pred_region
      _
    $region65: #{tpu_custom_call.1} parent=1 // pred_fallthru
      _
    %2437 = vsyncpa [#allocation4], 1
    %2438 = vsyncpa [#allocation6], 1

</llo_original>
